<compile_context>
chip_gen: v7x
topology: tpu7x:2x2x1
jax: 0.10.0
libtpu: 0.0.40
codegen_flags: <defaults>
</compile_context>

<pallas_src>
import functools

import jax
import jax.numpy as jnp
from jax import lax
from jax.experimental import pallas as pl
from jax.experimental.pallas import tpu as pltpu


def _round_up(x, m):
    return (x + m - 1) // m * m


def _fused_latlayer_kernel(xm_ref, xt_ref, xb_ref, w1_ref, b1_ref, w2_ref,
                           b2_ref, o_ref, h_ref, *, BH, W, PW, K1, CM, CO):
    """Conv3x3(C1->CM) + ReLU + Conv3x3(CM->CO) for one (BH, W) row tile.

    xm_ref : (1, BH, W, K1) bf16  im2col'd input, rows [i*BH, (i+1)*BH)
    xt_ref : (1, 1,  W, K1) bf16  im2col'd input, row i*BH-1   (clamped at top)
    xb_ref : (1, 1,  W, K1) bf16  im2col'd input, row (i+1)*BH (clamped at bot)
    w1_ref : (K1, CM) bf16 ;  b1_ref : (1, CM) f32
    w2_ref : (9*CM, CO) bf16 (row = (ky*3+kx)*CM + cm) ;  b2_ref : (1, CO) f32
    o_ref  : (1, BH*PW, CO)  flat output tile (pad columns cropped outside)
    h_ref  : VMEM (BH+3, PW, CM) f32  zero-ring-padded ReLU intermediate,
             row hr <-> image row i*BH + hr - 1, col hc <-> image col hc - 1
    """
    i = pl.program_id(1)
    ng = pl.num_programs(1)
    f32 = jnp.float32

    # --- Stage 0: zero only conv2's padding ring (interior is overwritten) ---
    h_ref[:, 0:1, :] = jnp.zeros((BH + 3, 1, CM), f32)                # left pad col
    h_ref[:, W + 1:PW, :] = jnp.zeros((BH + 3, PW - W - 1, CM), f32)  # right pad cols
    h_ref[BH + 2:BH + 3, :, :] = jnp.zeros((1, PW, CM), f32)          # flat-tap slack

    w1 = w1_ref[...]
    b1 = b1_ref[...]

    # --- Stage 1: conv1 + ReLU (im2col already done in the wrapper) ----------
    hm = jnp.dot(xm_ref[0].reshape(BH * W, K1), w1, preferred_element_type=f32)
    hm = jnp.maximum(hm + b1, 0.0)
    h_ref[1:BH + 1, 1:W + 1, :] = hm.reshape(BH, W, CM)

    # 1-row halos; masked to zero at the image borders (the clamped halo fetch
    # holds junk there).  The two dots are tiny (W rows, K = 9*C1).
    ht = jnp.dot(xt_ref[0].reshape(W, K1), w1, preferred_element_type=f32)
    ht = jnp.where(i > 0, jnp.maximum(ht + b1, 0.0), 0.0)
    h_ref[0:1, 1:W + 1, :] = ht.reshape(1, W, CM)

    hb = jnp.dot(xb_ref[0].reshape(W, K1), w1, preferred_element_type=f32)
    hb = jnp.where(i < ng - 1, jnp.maximum(hb + b1, 0.0), 0.0)
    h_ref[BH + 1:BH + 2, 1:W + 1, :] = hb.reshape(1, W, CM)

    # --- Stage 2: conv2 as 3 accumulating matmuls, K = 3*CM each -------------
    # Tap (ky, kx) of the 3x3 window is a static row-offset slice ky*PW + kx of
    # the flat padded h buffer (sublane shifts only).
    R2 = BH * PW
    hflat = h_ref[...].reshape((BH + 3) * PW, CM)
    w2 = w2_ref[...]
    acc = jnp.zeros((R2, CO), f32)
    for ky in range(3):                       # unrolled at trace time
        off = ky * PW
        patch = jnp.concatenate(
            [hflat[off:off + R2, :],
             hflat[off + 1:off + 1 + R2, :],
             hflat[off + 2:off + 2 + R2, :]], axis=-1).astype(jnp.bfloat16)
        acc = acc + jnp.dot(patch, w2[3 * CM * ky:3 * CM * (ky + 1), :],
                            preferred_element_type=f32)
    o_ref[0] = (acc + b2_ref[...]).astype(o_ref.dtype)


def _vmem_estimate(BH, W, PW, K1, CM, CO, out_itemsize):
    """Rough per-step VMEM footprint in bytes for tile height BH."""
    h_scratch = (BH + 3) * PW * CM * 4                       # f32 intermediate
    in_blocks = 2 * BH * W * K1 * 2 + 2 * 2 * W * K1 * 2     # double-buffered bf16
    out_blocks = 2 * BH * PW * CO * out_itemsize             # double-buffered
    weights = (K1 * CM + 9 * CM * CO) * 2 + (CM + CO) * 4
    temps = BH * PW * (3 * CM * 2 + 2 * CO * 4)              # per-ky patch + f32 acc
    return h_scratch + in_blocks + out_blocks + weights + temps


def _pick_block_h(N, H, W, PW, K1, CM, CO, out_itemsize,
                  budget_bytes=12 * 1024 * 1024):
    """Largest divisor of H whose per-step footprint fits the VMEM budget.

    The 12 MiB budget is conservative for v5e's 16 MiB scoped-VMEM default and
    leaves headroom on v7x (64 MiB physical); vmem_limit_bytes is raised to
    32 MiB in the pallas_call anyway.
    """
    divisors = sorted((d for d in range(1, H + 1) if H % d == 0), reverse=True)
    bh = 1
    for d in divisors:
        if _vmem_estimate(d, W, PW, K1, CM, CO, out_itemsize) <= budget_bytes:
            bh = d
            break
    # Make sure the grid has >= 2 steps so both TensorCores (v7x) get work.
    if N * (H // bh) < 2:
        for d in divisors:
            if d < bh and _vmem_estimate(d, W, PW, K1, CM, CO,
                                         out_itemsize) <= budget_bytes:
                bh = d
                break
    return bh


def latlayer_fused(x_nhwc, w1, b1, w2, b2, *, block_h=None):
    """x_nhwc: (N,H,W,C1) f32; w1: (9*C1,CM); w2: (9*CM,CO). Returns (N,H,W,CO)."""
    N, H, W, C1 = x_nhwc.shape
    CM = b1.shape[0]
    CO = b2.shape[0]
    K1 = 9 * C1
    assert w1.shape == (K1, CM) and w2.shape == (9 * CM, CO)

    PW = _round_up(W + 2, 8)            # padded width (multiple of 8 sublanes)
    out_it = jnp.dtype(x_nhwc.dtype).itemsize
    BH = block_h if block_h is not None else _pick_block_h(
        N, H, W, PW, K1, CM, CO, out_it)
    assert H % BH == 0, (H, BH)
    G = H // BH
    R2 = BH * PW

    # im2col for conv1 in XLA (channel k = (ky*3+kx)*C1 + cin), cast to bf16 so
    # the kernel input DMA is halved and the MXU gets bf16 operands directly.
    xpad = jnp.pad(x_nhwc, ((0, 0), (1, 1), (1, 1), (0, 0)))
    xim = jnp.concatenate(
        [xpad[:, ky:ky + H, kx:kx + W, :] for ky in range(3) for kx in range(3)],
        axis=-1).astype(jnp.bfloat16)                         # (N, H, W, 9*C1)

    w1b = w1.astype(jnp.bfloat16)
    w2b = w2.astype(jnp.bfloat16)
    b1f = b1.reshape(1, CM).astype(jnp.float32)
    b2f = b2.reshape(1, CO).astype(jnp.float32)

    kernel = functools.partial(_fused_latlayer_kernel, BH=BH, W=W, PW=PW,
                               K1=K1, CM=CM, CO=CO)

    flops = 2 * N * H * W * (K1 * CM + 9 * CM * CO)
    bytes_accessed = (N * H * W * K1 * 2 + N * H * PW * CO * out_it
                      + (K1 * CM + 9 * CM * CO) * 2 + (CM + CO) * 4)

    y = pl.pallas_call(
        kernel,
        out_shape=jax.ShapeDtypeStruct((N, H * PW, CO), x_nhwc.dtype),
        grid=(N, G),
        in_specs=[
            # main rows of this tile
            pl.BlockSpec((1, BH, W, K1), lambda n, i: (n, i, 0, 0)),
            # 1-row top halo (clamped at the border; masked in-kernel)
            pl.BlockSpec((1, 1, W, K1),
                         lambda n, i: (n, jnp.maximum(i * BH - 1, 0), 0, 0)),
            # 1-row bottom halo
            pl.BlockSpec((1, 1, W, K1),
                         lambda n, i: (n, jnp.minimum((i + 1) * BH, H - 1), 0, 0)),
            # weights / biases: constant index maps -> fetched once, VMEM resident
            pl.BlockSpec((K1, CM), lambda n, i: (0, 0)),
            pl.BlockSpec((1, CM), lambda n, i: (0, 0)),
            pl.BlockSpec((9 * CM, CO), lambda n, i: (0, 0)),
            pl.BlockSpec((1, CO), lambda n, i: (0, 0)),
        ],
        out_specs=pl.BlockSpec((1, R2, CO), lambda n, i: (n, i, 0)),
        scratch_shapes=[pltpu.VMEM((BH + 3, PW, CM), jnp.float32)],
        compiler_params=pltpu.CompilerParams(
            dimension_semantics=("parallel", "parallel"),
            vmem_limit_bytes=32 * 1024 * 1024),
        cost_estimate=pl.CostEstimate(flops=flops, transcendentals=0,
                                      bytes_accessed=bytes_accessed),
    )(xim, xim, xim, w1b, b1f, w2b, b2f)

    # Drop the pad columns: (N, H*PW, CO) -> (N, H, W, CO).
    return y.reshape(N, H, PW, CO)[:, :, :W, :]


def init_latlayer_params(key, in_channel, dtype=jnp.float32):
    """Synthetic init for nn.Conv2d(in,64,3) -> ReLU -> nn.Conv2d(64,64,3).

    Weights are stored in im2col layout (9*Cin, Cout), tap-major rows
    (row = (ky*3+kx)*Cin + cin), which is what the fused kernel consumes.
    """
    k1, k2, k3, k4 = jax.random.split(key, 4)
    w1 = (jax.random.normal(k1, (3, 3, in_channel, 64), dtype)
          * (1.0 / (3 * 3 * in_channel) ** 0.5)).reshape(9 * in_channel, 64)
    b1 = jax.random.normal(k2, (64,), dtype) * 0.01
    w2 = (jax.random.normal(k3, (3, 3, 64, 64), dtype)
          * (1.0 / (3 * 3 * 64) ** 0.5)).reshape(9 * 64, 64)
    b2 = jax.random.normal(k4, (64,), dtype) * 0.01
    return {"w1": w1, "b1": b1, "w2": w2, "b2": b2}


@jax.jit
def latlayer_forward(x_nchw, params):
    """Equivalent to LatLayer.forward: Conv3x3 -> ReLU -> Conv3x3 (NCHW in/out)."""
    x = jnp.transpose(x_nchw, (0, 2, 3, 1))          # NCHW -> NHWC
    y = latlayer_fused(x, params["w1"], params["b1"],
                       params["w2"], params["b2"])
    return jnp.transpose(y, (0, 3, 1, 2))            # NHWC -> NCHW


def _reference_forward(x_nchw, params):
    """Pure-JAX reference (lax conv, f32 accumulation).

    Uses the same bf16-rounded weights / input the kernel consumes, so the only
    remaining difference is the kernel's bf16 rounding of the conv2 operand.
    """
    def q(a):  # bf16 quantize, compute in f32
        return a.astype(jnp.bfloat16).astype(jnp.float32)

    def conv(x, wmat, b, relu):
        cout = wmat.shape[-1]
        cin = wmat.shape[0] // 9
        w = q(wmat).reshape(3, 3, cin, cout)
        y = lax.conv_general_dilated(
            x, w, window_strides=(1, 1), padding="SAME",
            dimension_numbers=("NHWC", "HWIO", "NHWC"),
            precision=lax.Precision.HIGHEST)
        y = y + b.reshape(1, 1, 1, cout).astype(jnp.float32)
        return jnp.maximum(y, 0.0) if relu else y

    x = q(jnp.transpose(x_nchw, (0, 2, 3, 1)))
    h = conv(x, params["w1"], params["b1"], True)
    y = conv(h, params["w2"], params["b2"], False)
    return jnp.transpose(y, (0, 3, 1, 2))


if __name__ == "__main__":
    key = jax.random.PRNGKey(0)
    kx, kp = jax.random.split(key)

    N, Cin, H, W = 2, 4, 16, 16
    x = jax.random.normal(kx, (N, Cin, H, W), jnp.float32)
    params = init_latlayer_params(kp, Cin)

    out = jax.block_until_ready(latlayer_forward(x, params))

    ref = _reference_forward(x, params)
    assert out.shape == (N, 64, H, W), out.shape
    max_err = float(jnp.max(jnp.abs(out - ref)))
    assert jnp.allclose(out, ref, rtol=2e-2, atol=2e-2), (
        f"mismatch vs reference, max abs err = {max_err}")

    print("KERNEL_OK")
</pallas_src>

<mosaic_0001>
module attributes {stable_mosaic.version = 11 : i64} {
  func.func @_fused_latlayer_kernel(%arg0: i32, %arg1: i32, %arg2: memref<1x16x16x36xbf16, #tpu.memory_space<vmem>>, %arg3: memref<1x1x16x36xbf16, #tpu.memory_space<vmem>>, %arg4: memref<1x1x16x36xbf16, #tpu.memory_space<vmem>>, %arg5: memref<36x64xbf16, #tpu.memory_space<vmem>>, %arg6: memref<1x64xf32, #tpu.memory_space<vmem>>, %arg7: memref<576x64xbf16, #tpu.memory_space<vmem>>, %arg8: memref<1x64xf32, #tpu.memory_space<vmem>>, %arg9: memref<1x384x64xf32, #tpu.memory_space<vmem>>, %arg10: memref<19x24x64xf32, #tpu.memory_space<vmem>>) attributes {dimension_semantics = [#tpu.dimension_semantics<parallel>, #tpu.dimension_semantics<parallel>], iteration_bounds = array<i64: 2, 1>, scalar_prefetch = 0 : i64, scratch_operands = 1 : i64, tpu.core_type = #tpu.core_type<tc>, window_params = [{transform_indices = @transform_0, window_bounds = array<i64: 1, 16, 16, 36>}, {transform_indices = @transform_1, window_bounds = array<i64: 1, 1, 16, 36>}, {transform_indices = @transform_2, window_bounds = array<i64: 1, 1, 16, 36>}, {pipeline_mode = #tpu.pipeline_mode<synchronous>, transform_indices = @transform_3, window_bounds = array<i64: 36, 64>}, {pipeline_mode = #tpu.pipeline_mode<synchronous>, transform_indices = @transform_4, window_bounds = array<i64: 1, 64>}, {pipeline_mode = #tpu.pipeline_mode<synchronous>, transform_indices = @transform_5, window_bounds = array<i64: 576, 64>}, {pipeline_mode = #tpu.pipeline_mode<synchronous>, transform_indices = @transform_6, window_bounds = array<i64: 1, 64>}, {transform_indices = @transform_7, window_bounds = array<i64: 1, 384, 64>}]} {
    %cst = arith.constant 0.000000e+00 : f32
    %0 = vector.broadcast %cst : f32 to vector<19x1x64xf32>
    %c0 = arith.constant 0 : index
    %c0_0 = arith.constant 0 : index
    %c0_1 = arith.constant 0 : index
    %1 = vector.load %arg10[%c0, %c0_0, %c0_1] : memref<19x24x64xf32, #tpu.memory_space<vmem>>, vector<19x1x64xf32>
    tpu.vector_store %arg10[%c0, %c0_0, %c0_1], %0 {strides = array<i32>} : memref<19x24x64xf32, #tpu.memory_space<vmem>>, vector<19x1x64xf32>,
    %cst_2 = arith.constant 0.000000e+00 : f32
    %2 = vector.broadcast %cst_2 : f32 to vector<19x7x64xf32>
    %c0_3 = arith.constant 0 : index
    %c17 = arith.constant 17 : index
    %c0_4 = arith.constant 0 : index
    %3 = vector.load %arg10[%c0_3, %c17, %c0_4] : memref<19x24x64xf32, #tpu.memory_space<vmem>>, vector<19x7x64xf32>
    tpu.vector_store %arg10[%c0_3, %c17, %c0_4], %2 {strides = array<i32>} : memref<19x24x64xf32, #tpu.memory_space<vmem>>, vector<19x7x64xf32>,
    %cst_5 = arith.constant 0.000000e+00 : f32
    %4 = vector.broadcast %cst_5 : f32 to vector<1x24x64xf32>
    %c18 = arith.constant 18 : index
    %c0_6 = arith.constant 0 : index
    %c0_7 = arith.constant 0 : index
    %5 = vector.load %arg10[%c18, %c0_6, %c0_7] : memref<19x24x64xf32, #tpu.memory_space<vmem>>, vector<1x24x64xf32>
    tpu.vector_store %arg10[%c18, %c0_6, %c0_7], %4 {strides = array<i32>} : memref<19x24x64xf32, #tpu.memory_space<vmem>>, vector<1x24x64xf32>,
    %c0_8 = arith.constant 0 : index
    %c0_9 = arith.constant 0 : index
    %6 = vector.load %arg5[%c0_8, %c0_9] : memref<36x64xbf16, #tpu.memory_space<vmem>>, vector<36x64xbf16>
    %c0_10 = arith.constant 0 : index
    %c0_11 = arith.constant 0 : index
    %7 = vector.load %arg6[%c0_10, %c0_11] : memref<1x64xf32, #tpu.memory_space<vmem>>, vector<1x64xf32>
    %c0_12 = arith.constant 0 : index
    %c0_13 = arith.constant 0 : index
    %c0_14 = arith.constant 0 : index
    %c0_15 = arith.constant 0 : index
    %8 = vector.load %arg2[%c0_12, %c0_13, %c0_14, %c0_15] : memref<1x16x16x36xbf16, #tpu.memory_space<vmem>>, vector<1x16x16x36xbf16>
    %9 = vector.shape_cast %8 : vector<1x16x16x36xbf16> to vector<16x16x36xbf16>
    %10 = vector.shape_cast %9 : vector<16x16x36xbf16> to vector<256x36xbf16>
    %cst_16 = arith.constant dense<0.000000e+00> : vector<256x64xf32>
    %11 = tpu.matmul %10, %6, %cst_16 {dimension_numbers = #tpu.dot_dimension_numbers<[1], [0], [0], [1], [0, 0, 1, 1], [], []>} : vector<256x36xbf16>, vector<36x64xbf16>, vector<256x64xf32> -> vector<256x64xf32>
    %12 = vector.broadcast %7 : vector<1x64xf32> to vector<256x64xf32>
    %13 = arith.addf %11, %12 : vector<256x64xf32>
    %cst_17 = arith.constant 0.000000e+00 : f32
    %14 = vector.broadcast %cst_17 : f32 to vector<256x64xf32>
    %15 = arith.maximumf %13, %14 : vector<256x64xf32>
    %16 = vector.shape_cast %15 : vector<256x64xf32> to vector<16x16x64xf32>
    %c1 = arith.constant 1 : index
    %c1_18 = arith.constant 1 : index
    %c0_19 = arith.constant 0 : index
    %17 = vector.load %arg10[%c1, %c1_18, %c0_19] : memref<19x24x64xf32, #tpu.memory_space<vmem>>, vector<16x16x64xf32>
    tpu.vector_store %arg10[%c1, %c1_18, %c0_19], %16 {strides = array<i32>} : memref<19x24x64xf32, #tpu.memory_space<vmem>>, vector<16x16x64xf32>,
    %c0_20 = arith.constant 0 : index
    %c0_21 = arith.constant 0 : index
    %c0_22 = arith.constant 0 : index
    %c0_23 = arith.constant 0 : index
    %18 = vector.load %arg3[%c0_20, %c0_21, %c0_22, %c0_23] : memref<1x1x16x36xbf16, #tpu.memory_space<vmem>>, vector<1x1x16x36xbf16>
    %19 = vector.shape_cast %18 : vector<1x1x16x36xbf16> to vector<1x16x36xbf16>
    %20 = vector.shape_cast %19 : vector<1x16x36xbf16> to vector<16x36xbf16>
    %cst_24 = arith.constant dense<0.000000e+00> : vector<16x64xf32>
    %21 = tpu.matmul %20, %6, %cst_24 {dimension_numbers = #tpu.dot_dimension_numbers<[1], [0], [0], [1], [0, 0, 1, 1], [], []>} : vector<16x36xbf16>, vector<36x64xbf16>, vector<16x64xf32> -> vector<16x64xf32>
    %c0_i32 = arith.constant 0 : i32
    %22 = arith.cmpi sgt, %arg1, %c0_i32 : i32
    %23 = vector.broadcast %7 : vector<1x64xf32> to vector<16x64xf32>
    %24 = arith.addf %21, %23 : vector<16x64xf32>
    %cst_25 = arith.constant 0.000000e+00 : f32
    %25 = vector.broadcast %cst_25 : f32 to vector<16x64xf32>
    %26 = arith.maximumf %24, %25 : vector<16x64xf32>
    %cst_26 = arith.constant 0.000000e+00 : f32
    %27 = vector.broadcast %cst_26 : f32 to vector<16x64xf32>
    %28 = arith.select %22, %26, %27 : vector<16x64xf32>
    %29 = vector.shape_cast %28 : vector<16x64xf32> to vector<1x16x64xf32>
    %c0_27 = arith.constant 0 : index
    %c1_28 = arith.constant 1 : index
    %c0_29 = arith.constant 0 : index
    %30 = vector.load %arg10[%c0_27, %c1_28, %c0_29] : memref<19x24x64xf32, #tpu.memory_space<vmem>>, vector<1x16x64xf32>
    tpu.vector_store %arg10[%c0_27, %c1_28, %c0_29], %29 {strides = array<i32>} : memref<19x24x64xf32, #tpu.memory_space<vmem>>, vector<1x16x64xf32>,
    %c0_30 = arith.constant 0 : index
    %c0_31 = arith.constant 0 : index
    %c0_32 = arith.constant 0 : index
    %c0_33 = arith.constant 0 : index
    %31 = vector.load %arg4[%c0_30, %c0_31, %c0_32, %c0_33] : memref<1x1x16x36xbf16, #tpu.memory_space<vmem>>, vector<1x1x16x36xbf16>
    %32 = vector.shape_cast %31 : vector<1x1x16x36xbf16> to vector<1x16x36xbf16>
    %33 = vector.shape_cast %32 : vector<1x16x36xbf16> to vector<16x36xbf16>
    %cst_34 = arith.constant dense<0.000000e+00> : vector<16x64xf32>
    %34 = tpu.matmul %33, %6, %cst_34 {dimension_numbers = #tpu.dot_dimension_numbers<[1], [0], [0], [1], [0, 0, 1, 1], [], []>} : vector<16x36xbf16>, vector<36x64xbf16>, vector<16x64xf32> -> vector<16x64xf32>
    %c0_i32_35 = arith.constant 0 : i32
    %35 = arith.cmpi slt, %arg1, %c0_i32_35 : i32
    %36 = vector.broadcast %7 : vector<1x64xf32> to vector<16x64xf32>
    %37 = arith.addf %34, %36 : vector<16x64xf32>
    %cst_36 = arith.constant 0.000000e+00 : f32
    %38 = vector.broadcast %cst_36 : f32 to vector<16x64xf32>
    %39 = arith.maximumf %37, %38 : vector<16x64xf32>
    %cst_37 = arith.constant 0.000000e+00 : f32
    %40 = vector.broadcast %cst_37 : f32 to vector<16x64xf32>
    %41 = arith.select %35, %39, %40 : vector<16x64xf32>
    %42 = vector.shape_cast %41 : vector<16x64xf32> to vector<1x16x64xf32>
    %c17_38 = arith.constant 17 : index
    %c1_39 = arith.constant 1 : index
    %c0_40 = arith.constant 0 : index
    %43 = vector.load %arg10[%c17_38, %c1_39, %c0_40] : memref<19x24x64xf32, #tpu.memory_space<vmem>>, vector<1x16x64xf32>
    tpu.vector_store %arg10[%c17_38, %c1_39, %c0_40], %42 {strides = array<i32>} : memref<19x24x64xf32, #tpu.memory_space<vmem>>, vector<1x16x64xf32>,
    %c0_41 = arith.constant 0 : index
    %c0_42 = arith.constant 0 : index
    %c0_43 = arith.constant 0 : index
    %44 = vector.load %arg10[%c0_41, %c0_42, %c0_43] : memref<19x24x64xf32, #tpu.memory_space<vmem>>, vector<19x24x64xf32>
    %45 = vector.shape_cast %44 : vector<19x24x64xf32> to vector<456x64xf32>
    %c0_44 = arith.constant 0 : index
    %c0_45 = arith.constant 0 : index
    %46 = vector.load %arg7[%c0_44, %c0_45] : memref<576x64xbf16, #tpu.memory_space<vmem>>, vector<576x64xbf16>
    %cst_46 = arith.constant 0.000000e+00 : f32
    %47 = vector.broadcast %cst_46 : f32 to vector<384x64xf32>
    %48 = vector.extract_strided_slice %45 {offsets = [0, 0], sizes = [384, 64], strides = [1, 1]} : vector<456x64xf32> to vector<384x64xf32>
    %49 = vector.extract_strided_slice %45 {offsets = [1, 0], sizes = [384, 64], strides = [1, 1]} : vector<456x64xf32> to vector<384x64xf32>
    %50 = vector.extract_strided_slice %45 {offsets = [2, 0], sizes = [384, 64], strides = [1, 1]} : vector<456x64xf32> to vector<384x64xf32>
    %51 = tpu.concatenate %48, %49, %50 in 1 : vector<384x64xf32>, vector<384x64xf32>, vector<384x64xf32> -> vector<384x192xf32>
    %52 = arith.truncf %51 : vector<384x192xf32> to vector<384x192xbf16>
    %53 = vector.extract_strided_slice %46 {offsets = [0, 0], sizes = [192, 64], strides = [1, 1]} : vector<576x64xbf16> to vector<192x64xbf16>
    %cst_47 = arith.constant dense<0.000000e+00> : vector<384x64xf32>
    %54 = tpu.matmul %52, %53, %cst_47 {dimension_numbers = #tpu.dot_dimension_numbers<[1], [0], [0], [1], [0, 0, 1, 1], [], []>} : vector<384x192xbf16>, vector<192x64xbf16>, vector<384x64xf32> -> vector<384x64xf32>
    %55 = arith.addf %47, %54 : vector<384x64xf32>
    %56 = vector.extract_strided_slice %45 {offsets = [24, 0], sizes = [384, 64], strides = [1, 1]} : vector<456x64xf32> to vector<384x64xf32>
    %57 = vector.extract_strided_slice %45 {offsets = [25, 0], sizes = [384, 64], strides = [1, 1]} : vector<456x64xf32> to vector<384x64xf32>
    %58 = vector.extract_strided_slice %45 {offsets = [26, 0], sizes = [384, 64], strides = [1, 1]} : vector<456x64xf32> to vector<384x64xf32>
    %59 = tpu.concatenate %56, %57, %58 in 1 : vector<384x64xf32>, vector<384x64xf32>, vector<384x64xf32> -> vector<384x192xf32>
    %60 = arith.truncf %59 : vector<384x192xf32> to vector<384x192xbf16>
    %61 = vector.extract_strided_slice %46 {offsets = [192, 0], sizes = [192, 64], strides = [1, 1]} : vector<576x64xbf16> to vector<192x64xbf16>
    %cst_48 = arith.constant dense<0.000000e+00> : vector<384x64xf32>
    %62 = tpu.matmul %60, %61, %cst_48 {dimension_numbers = #tpu.dot_dimension_numbers<[1], [0], [0], [1], [0, 0, 1, 1], [], []>} : vector<384x192xbf16>, vector<192x64xbf16>, vector<384x64xf32> -> vector<384x64xf32>
    %63 = arith.addf %55, %62 : vector<384x64xf32>
    %64 = vector.extract_strided_slice %45 {offsets = [48, 0], sizes = [384, 64], strides = [1, 1]} : vector<456x64xf32> to vector<384x64xf32>
    %65 = vector.extract_strided_slice %45 {offsets = [49, 0], sizes = [384, 64], strides = [1, 1]} : vector<456x64xf32> to vector<384x64xf32>
    %66 = vector.extract_strided_slice %45 {offsets = [50, 0], sizes = [384, 64], strides = [1, 1]} : vector<456x64xf32> to vector<384x64xf32>
    %67 = tpu.concatenate %64, %65, %66 in 1 : vector<384x64xf32>, vector<384x64xf32>, vector<384x64xf32> -> vector<384x192xf32>
    %68 = arith.truncf %67 : vector<384x192xf32> to vector<384x192xbf16>
    %69 = vector.extract_strided_slice %46 {offsets = [384, 0], sizes = [192, 64], strides = [1, 1]} : vector<576x64xbf16> to vector<192x64xbf16>
    %cst_49 = arith.constant dense<0.000000e+00> : vector<384x64xf32>
    %70 = tpu.matmul %68, %69, %cst_49 {dimension_numbers = #tpu.dot_dimension_numbers<[1], [0], [0], [1], [0, 0, 1, 1], [], []>} : vector<384x192xbf16>, vector<192x64xbf16>, vector<384x64xf32> -> vector<384x64xf32>
    %71 = arith.addf %63, %70 : vector<384x64xf32>
    %c0_50 = arith.constant 0 : index
    %c0_51 = arith.constant 0 : index
    %72 = vector.load %arg8[%c0_50, %c0_51] : memref<1x64xf32, #tpu.memory_space<vmem>>, vector<1x64xf32>
    %73 = vector.broadcast %72 : vector<1x64xf32> to vector<384x64xf32>
    %74 = arith.addf %71, %73 : vector<384x64xf32>
    %c0_52 = arith.constant 0 : index
    %c0_53 = arith.constant 0 : index
    %c0_54 = arith.constant 0 : index
    %75 = vector.load %arg9[%c0_52, %c0_53, %c0_54] : memref<1x384x64xf32, #tpu.memory_space<vmem>>, vector<1x384x64xf32>
    %76 = vector.shape_cast %75 : vector<1x384x64xf32> to vector<384x64xf32>
    %77 = vector.shape_cast %74 : vector<384x64xf32> to vector<1x384x64xf32>
    tpu.vector_store %arg9[%c0_52, %c0_53, %c0_54], %77 {strides = array<i32>} : memref<1x384x64xf32, #tpu.memory_space<vmem>>, vector<1x384x64xf32>,
    return
  }
  func.func @transform_0(%arg0: i32, %arg1: i32) -> (i32, i32, i32, i32) {
    %c0_i32 = arith.constant 0 : i32
    %c0_i32_0 = arith.constant 0 : i32
    %c0_i32_1 = arith.constant 0 : i32
    return %arg0, %arg1, %c0_i32, %c0_i32_0 : i32, i32, i32, i32
  }
  func.func @transform_1(%arg0: i32, %arg1: i32) -> (i32, i32, i32, i32) {
    %c16_i32 = arith.constant 16 : i32
    %0 = arith.muli %arg1, %c16_i32 : i32
    %c1_i32 = arith.constant 1 : i32
    %1 = arith.subi %0, %c1_i32 : i32
    %c0_i32 = arith.constant 0 : i32
    %2 = arith.maxsi %1, %c0_i32 : i32
    %c0_i32_0 = arith.constant 0 : i32
    %c0_i32_1 = arith.constant 0 : i32
    %c0_i32_2 = arith.constant 0 : i32
    return %arg0, %2, %c0_i32_0, %c0_i32_1 : i32, i32, i32, i32
  }
  func.func @transform_2(%arg0: i32, %arg1: i32) -> (i32, i32, i32, i32) {
    %c1_i32 = arith.constant 1 : i32
    %0 = arith.addi %arg1, %c1_i32 : i32
    %c16_i32 = arith.constant 16 : i32
    %1 = arith.muli %0, %c16_i32 : i32
    %c15_i32 = arith.constant 15 : i32
    %2 = arith.minsi %1, %c15_i32 : i32
    %c0_i32 = arith.constant 0 : i32
    %c0_i32_0 = arith.constant 0 : i32
    %c0_i32_1 = arith.constant 0 : i32
    return %arg0, %2, %c0_i32, %c0_i32_0 : i32, i32, i32, i32
  }
  func.func @transform_3(%arg0: i32, %arg1: i32) -> (i32, i32) {
    %c0_i32 = arith.constant 0 : i32
    %c0_i32_0 = arith.constant 0 : i32
    %c0_i32_1 = arith.constant 0 : i32
    return %c0_i32, %c0_i32_0 : i32, i32
  }
  func.func @transform_4(%arg0: i32, %arg1: i32) -> (i32, i32) {
    %c0_i32 = arith.constant 0 : i32
    %c0_i32_0 = arith.constant 0 : i32
    %c0_i32_1 = arith.constant 0 : i32
    return %c0_i32, %c0_i32_0 : i32, i32
  }
  func.func @transform_5(%arg0: i32, %arg1: i32) -> (i32, i32) {
    %c0_i32 = arith.constant 0 : i32
    %c0_i32_0 = arith.constant 0 : i32
    %c0_i32_1 = arith.constant 0 : i32
    return %c0_i32, %c0_i32_0 : i32, i32
  }
  func.func @transform_6(%arg0: i32, %arg1: i32) -> (i32, i32) {
    %c0_i32 = arith.constant 0 : i32
    %c0_i32_0 = arith.constant 0 : i32
    %c0_i32_1 = arith.constant 0 : i32
    return %c0_i32, %c0_i32_0 : i32, i32
  }
  func.func @transform_7(%arg0: i32, %arg1: i32) -> (i32, i32, i32) {
    %c0_i32 = arith.constant 0 : i32
    %c0_i32_0 = arith.constant 0 : i32
    return %arg0, %arg1, %c0_i32 : i32, i32, i32
  }
}

</mosaic_0001>

<llo_original>
// kernel: latlayer_forward.1
$region0: #{latlayer_forward.1}
  #allocation0 [shape = 'u32[]', space=smem, size = 0x4, offset = 0x4, fixed_abs, tag = 'smem constant byte address 0x4 - core index']
  #allocation1 [shape = 'u32[144,128]{1,0:T(1,128)}', space=vmem, size = 0x12000, scoped, tag = 'internal scratch']
  #allocation2 [shape = 'f32[19,24,64]{2,1,0:T(8,128)}', space=vmem, size = 0x39000, scoped, tag = 'scratch operand']
  %s0 = inlined_call_operand.vmem [shape: bf16[2,16,16,36], index: 0, kind: input, shape index: {}, may-alias: {0,1,2}]
  %s1 = inlined_call_operand.vmem [shape: bf16[2,16,16,36], index: 1, kind: input, shape index: {}, may-alias: {0,1,2}]
  %s2 = inlined_call_operand.vmem [shape: bf16[2,16,16,36], index: 2, kind: input, shape index: {}, may-alias: {0,1,2}]
  %s3 = inlined_call_operand.vmem [shape: bf16[36,64], index: 3, kind: input, shape index: {}]
  %s4 = inlined_call_operand.vmem [shape: f32[1,64], index: 4, kind: input, shape index: {}]
  %s5 = inlined_call_operand.vmem [shape: bf16[576,64], index: 5, kind: input, shape index: {}]
  %s6 = inlined_call_operand.vmem [shape: f32[1,64], index: 6, kind: input, shape index: {}]
  %s7 = inlined_call_operand.vmem [shape: f32[2,384,64], index: 7, kind: output, shape index: {}]
  %s8 = sld [smem:[#allocation0]]
  $region61: #{latlayer_forward.1} parent=0
    _
  %s10 = ssub.s32 1, %s8
  %s11 = scalar_select 0, %s10, %s8
  loop: start=0, step=1, limit=4
  $region2: #{latlayer_forward.1} parent=0 // loop_pre_header
    _
  $region3: #{latlayer_forward.1} parent=0 // loop_header
    %s13 = sphi 0, %s17
    %p14 = scmp.ge.s32.totalorder %s13, 4
    %s20 = sphi 0, %s32
    %s21 = sphi 0, %s28
    %s22 = sphi 0, %s20
    %s23 = sphi 0, %s21
    %s24 = sphi 0, %s22
    %s25 = sphi 0, %s23
    %s37 = sphi 0, %s39
    %s40 = sphi 0, %s37
    %s41 = sphi 0, %s40
    %s57 = sphi 0, %s41
    %s73 = sphi 0, %s75
    %s76 = sphi 0, %s73
    %s77 = sphi 0, %s76
    %s93 = sphi 0, %s77
    %s109 = sphi 0, %s111
    %s112 = sphi 0, %s109
    %s113 = sphi 0, %s112
    %s129 = sphi 0, %s113
    %s133 = sphi 0, %s133
    %s135 = sphi 0, %s133
    %s136 = sphi 0, %s135
    %s150 = sphi 0, %s136
    %s154 = sphi 0, %s154
    %s156 = sphi 0, %s154
    %s157 = sphi 0, %s156
    %s171 = sphi 0, %s157
    %s175 = sphi 0, %s175
    %s177 = sphi 0, %s175
    %s178 = sphi 0, %s177
    %s192 = sphi 0, %s178
    %s196 = sphi 0, %s196
    %s198 = sphi 0, %s196
    %s199 = sphi 0, %s198
    %s213 = sphi 0, %s199
    %s221 = sphi 0, %s223
    %s224 = sphi 0, %s221
    %s225 = sphi 0, %s224
    %s241 = sphi 0, %s225
  $region4: #{latlayer_forward.1} parent=0 // loop_header_branch
    %16 = sbr.rel (%p14) target = $region8
  $region5: #{latlayer_forward.1} parent=0 // loop_body
    %s18 = ssub.s32 %s13, 1
    %s19 = ssub.s32 %s13, 2
    %s26 = sadd.s32 1, %s21
    %p27 = scmp.ge.s32.totalorder %s26, 1
    %s28 = scalar_select %p27, 0, %s26
    %s29 = sadd.s32 1, %s20
    %s30 = scalar_select %p27, %s29, %s20
    %p31 = scmp.ge.s32.totalorder %s30, 2
    %s32 = scalar_select %p31, 0, %s30
    %s33 = ssub.s32 %s20, %s32
    %s34 = ssub.s32 %s21, %s28
    %s35 = sor.u32 %s33, %s34
    %p36 = scmp.eq.s32.totalorder %s35, 0
    %s38 = sadd.s32 %s37, 1
    %s39 = scalar_select %p36, %s37, %s38
    %p42 = pneg %p36
    %p43 = scmp.eq.s32.totalorder %s13, 1
    %p44 = por %p42, %p43
    %p45 = scmp.ne.s32.totalorder %s37, %s40
    %p46 = scmp.eq.s32.totalorder %s13, 0
    %p47 = por %p45, %p46
    %p48 = scmp.ne.s32.totalorder %s37, %s40
    %p49 = scmp.eq.s32.totalorder %s18, 1
    %p50 = por %p48, %p49
    %p51 = scmp.ne.s32.totalorder %s40, %s41
    %p52 = scmp.eq.s32.totalorder %s18, 0
    %p53 = por %p51, %p52
    %p54 = scmp.ne.s32.totalorder %s40, %s41
    %p55 = scmp.eq.s32.totalorder %s19, 1
    %p56 = por %p54, %p55
    %p58 = scmp.ne.s32.totalorder %s41, %s57
    %p59 = scmp.eq.s32.totalorder %s19, 0
    %p60 = por %p58, %p59
    %s61 = smul.u32 %s21, 16
    %s62 = ssub.s32 %s61, 1
    %p63 = scmp.gt.s32.totalorder %s62, 0
    %s64 = scalar_select %p63, %s62, 0
    %s65 = smul.u32 %s28, 16
    %s66 = ssub.s32 %s65, 1
    %p67 = scmp.gt.s32.totalorder %s66, 0
    %s68 = scalar_select %p67, %s66, 0
    %s69 = ssub.s32 %s20, %s32
    %s70 = ssub.s32 %s64, %s68
    %s71 = sor.u32 %s69, %s70
    %p72 = scmp.eq.s32.totalorder %s71, 0
    %s74 = sadd.s32 %s73, 1
    %s75 = scalar_select %p72, %s73, %s74
    %p78 = pneg %p72
    %p79 = scmp.eq.s32.totalorder %s13, 1
    %p80 = por %p78, %p79
    %p81 = scmp.ne.s32.totalorder %s73, %s76
    %p82 = scmp.eq.s32.totalorder %s13, 0
    %p83 = por %p81, %p82
    %p84 = scmp.ne.s32.totalorder %s73, %s76
    %p85 = scmp.eq.s32.totalorder %s18, 1
    %p86 = por %p84, %p85
    %p87 = scmp.ne.s32.totalorder %s76, %s77
    %p88 = scmp.eq.s32.totalorder %s18, 0
    %p89 = por %p87, %p88
    %p90 = scmp.ne.s32.totalorder %s76, %s77
    %p91 = scmp.eq.s32.totalorder %s19, 1
    %p92 = por %p90, %p91
    %p94 = scmp.ne.s32.totalorder %s77, %s93
    %p95 = scmp.eq.s32.totalorder %s19, 0
    %p96 = por %p94, %p95
    %s97 = sadd.s32 %s21, 1
    %s98 = smul.u32 %s97, 16
    %p99 = scmp.lt.s32.totalorder %s98, 15
    %s100 = scalar_select %p99, %s98, 15
    %s101 = sadd.s32 %s28, 1
    %s102 = smul.u32 %s101, 16
    %p103 = scmp.lt.s32.totalorder %s102, 15
    %s104 = scalar_select %p103, %s102, 15
    %s105 = ssub.s32 %s20, %s32
    %s106 = ssub.s32 %s100, %s104
    %s107 = sor.u32 %s105, %s106
    %p108 = scmp.eq.s32.totalorder %s107, 0
    %s110 = sadd.s32 %s109, 1
    %s111 = scalar_select %p108, %s109, %s110
    %p114 = pneg %p108
    %p115 = scmp.eq.s32.totalorder %s13, 1
    %p116 = por %p114, %p115
    %p117 = scmp.ne.s32.totalorder %s109, %s112
    %p118 = scmp.eq.s32.totalorder %s13, 0
    %p119 = por %p117, %p118
    %p120 = scmp.ne.s32.totalorder %s109, %s112
    %p121 = scmp.eq.s32.totalorder %s18, 1
    %p122 = por %p120, %p121
    %p123 = scmp.ne.s32.totalorder %s112, %s113
    %p124 = scmp.eq.s32.totalorder %s18, 0
    %p125 = por %p123, %p124
    %p126 = scmp.ne.s32.totalorder %s112, %s113
    %p127 = scmp.eq.s32.totalorder %s19, 1
    %p128 = por %p126, %p127
    %p130 = scmp.ne.s32.totalorder %s113, %s129
    %p131 = scmp.eq.s32.totalorder %s19, 0
    %p132 = por %p130, %p131
    %s134 = sadd.s32 %s133, 1
    %p137 = scmp.eq.s32.totalorder %s13, 1
    %p138 = scmp.ne.s32.totalorder %s133, %s135
    %p139 = scmp.eq.s32.totalorder %s13, 0
    %p140 = por %p138, %p139
    %p141 = scmp.ne.s32.totalorder %s133, %s135
    %p142 = scmp.eq.s32.totalorder %s18, 1
    %p143 = por %p141, %p142
    %p144 = scmp.ne.s32.totalorder %s135, %s136
    %p145 = scmp.eq.s32.totalorder %s18, 0
    %p146 = por %p144, %p145
    %p147 = scmp.ne.s32.totalorder %s135, %s136
    %p148 = scmp.eq.s32.totalorder %s19, 1
    %p149 = por %p147, %p148
    %p151 = scmp.ne.s32.totalorder %s136, %s150
    %p152 = scmp.eq.s32.totalorder %s19, 0
    %p153 = por %p151, %p152
    %s155 = sadd.s32 %s154, 1
    %p158 = scmp.eq.s32.totalorder %s13, 1
    %p159 = scmp.ne.s32.totalorder %s154, %s156
    %p160 = scmp.eq.s32.totalorder %s13, 0
    %p161 = por %p159, %p160
    %p162 = scmp.ne.s32.totalorder %s154, %s156
    %p163 = scmp.eq.s32.totalorder %s18, 1
    %p164 = por %p162, %p163
    %p165 = scmp.ne.s32.totalorder %s156, %s157
    %p166 = scmp.eq.s32.totalorder %s18, 0
    %p167 = por %p165, %p166
    %p168 = scmp.ne.s32.totalorder %s156, %s157
    %p169 = scmp.eq.s32.totalorder %s19, 1
    %p170 = por %p168, %p169
    %p172 = scmp.ne.s32.totalorder %s157, %s171
    %p173 = scmp.eq.s32.totalorder %s19, 0
    %p174 = por %p172, %p173
    %s176 = sadd.s32 %s175, 1
    %p179 = scmp.eq.s32.totalorder %s13, 1
    %p180 = scmp.ne.s32.totalorder %s175, %s177
    %p181 = scmp.eq.s32.totalorder %s13, 0
    %p182 = por %p180, %p181
    %p183 = scmp.ne.s32.totalorder %s175, %s177
    %p184 = scmp.eq.s32.totalorder %s18, 1
    %p185 = por %p183, %p184
    %p186 = scmp.ne.s32.totalorder %s177, %s178
    %p187 = scmp.eq.s32.totalorder %s18, 0
    %p188 = por %p186, %p187
    %p189 = scmp.ne.s32.totalorder %s177, %s178
    %p190 = scmp.eq.s32.totalorder %s19, 1
    %p191 = por %p189, %p190
    %p193 = scmp.ne.s32.totalorder %s178, %s192
    %p194 = scmp.eq.s32.totalorder %s19, 0
    %p195 = por %p193, %p194
    %s197 = sadd.s32 %s196, 1
    %p200 = scmp.eq.s32.totalorder %s13, 1
    %p201 = scmp.ne.s32.totalorder %s196, %s198
    %p202 = scmp.eq.s32.totalorder %s13, 0
    %p203 = por %p201, %p202
    %p204 = scmp.ne.s32.totalorder %s196, %s198
    %p205 = scmp.eq.s32.totalorder %s18, 1
    %p206 = por %p204, %p205
    %p207 = scmp.ne.s32.totalorder %s198, %s199
    %p208 = scmp.eq.s32.totalorder %s18, 0
    %p209 = por %p207, %p208
    %p210 = scmp.ne.s32.totalorder %s198, %s199
    %p211 = scmp.eq.s32.totalorder %s19, 1
    %p212 = por %p210, %p211
    %p214 = scmp.ne.s32.totalorder %s199, %s213
    %p215 = scmp.eq.s32.totalorder %s19, 0
    %p216 = por %p214, %p215
    %s217 = ssub.s32 %s20, %s32
    %s218 = ssub.s32 %s21, %s28
    %s219 = sor.u32 %s217, %s218
    %p220 = scmp.eq.s32.totalorder %s219, 0
    %s222 = sadd.s32 %s221, 1
    %s223 = scalar_select %p220, %s221, %s222
    %p226 = pneg %p220
    %p227 = scmp.eq.s32.totalorder %s13, 1
    %p228 = por %p226, %p227
    %p229 = scmp.ne.s32.totalorder %s221, %s224
    %p230 = scmp.eq.s32.totalorder %s13, 0
    %p231 = por %p229, %p230
    %p232 = scmp.ne.s32.totalorder %s221, %s224
    %p233 = scmp.eq.s32.totalorder %s18, 1
    %p234 = por %p232, %p233
    %p235 = scmp.ne.s32.totalorder %s224, %s225
    %p236 = scmp.eq.s32.totalorder %s18, 0
    %p237 = por %p235, %p236
    %p238 = scmp.ne.s32.totalorder %s224, %s225
    %p239 = scmp.eq.s32.totalorder %s19, 1
    %p240 = por %p238, %p239
    %p242 = scmp.ne.s32.totalorder %s225, %s241
    %p243 = scmp.eq.s32.totalorder %s19, 0
    %p244 = por %p242, %p243
    %p245 = scmp.le.s32.totalorder 1, %s13
    %p246 = scmp.lt.s32.totalorder %s13, 3
    %p247 = pnand %p245, %p246
    %p248 = pneg %p247
    // Predicated region
    $region9: #{latlayer_forward.1} parent=5 // pred_check
      _
    $region10: #{latlayer_forward.1} parent=5 // pred_check_branch
      %250 = sbr.rel (%p247) target = $region12
    $region11: #{latlayer_forward.1} parent=5 // pred_region
      %s251 = ssub.s32 %s13, 1
      // Predicated region
      $region13: #{latlayer_forward.1} parent=11 // pred_check
        %p252 = pneg %p146
      $region14: #{latlayer_forward.1} parent=11 // pred_check_branch
        %254 = sbr.rel (%p252) target = $region16
      $region15: #{latlayer_forward.1} parent=11 // pred_region
        _
      $region16: #{latlayer_forward.1} parent=11 // pred_fallthru
        _
      // Predicated region
      $region17: #{latlayer_forward.1} parent=11 // pred_check
        %p255 = pneg %p167
      $region18: #{latlayer_forward.1} parent=11 // pred_check_branch
        %257 = sbr.rel (%p255) target = $region20
      $region19: #{latlayer_forward.1} parent=11 // pred_region
        _
      $region20: #{latlayer_forward.1} parent=11 // pred_fallthru
        _
      // Predicated region
      $region21: #{latlayer_forward.1} parent=11 // pred_check
        %p258 = pneg %p188
      $region22: #{latlayer_forward.1} parent=11 // pred_check_branch
        %260 = sbr.rel (%p258) target = $region24
      $region23: #{latlayer_forward.1} parent=11 // pred_region
        _
      $region24: #{latlayer_forward.1} parent=11 // pred_fallthru
        _
      // Predicated region
      $region25: #{latlayer_forward.1} parent=11 // pred_check
        %p261 = pneg %p209
      $region26: #{latlayer_forward.1} parent=11 // pred_check_branch
        %263 = sbr.rel (%p261) target = $region28
      $region27: #{latlayer_forward.1} parent=11 // pred_region
        _
      $region28: #{latlayer_forward.1} parent=11 // pred_fallthru
        _
    $region12: #{latlayer_forward.1} parent=5 // pred_fallthru
      _
    %p264 = scmp.lt.s32.totalorder %s13, 2
    // Predicated region
    $region29: #{latlayer_forward.1} parent=5 // pred_check
      %p265 = pneg %p264
    $region30: #{latlayer_forward.1} parent=5 // pred_check_branch
      %267 = sbr.rel (%p265) target = $region32
    $region31: #{latlayer_forward.1} parent=5 // pred_region
      // Predicated region
      $region33: #{latlayer_forward.1} parent=31 // pred_check
        %p268 = pneg %p47
      $region34: #{latlayer_forward.1} parent=31 // pred_check_branch
        %270 = sbr.rel (%p268) target = $region36
      $region35: #{latlayer_forward.1} parent=31 // pred_region
        %s271 = smul.u32 16, %s21
        %p272 = scmp.lt.s32.totalorder %s20, 1
        %s273 = scalar_select %p272, %s20, 1
        %p274 = scmp.lt.s32.totalorder %s271, 15
        %s275 = scalar_select %p274, %s271, 15
        %s276 = smul.addr %s275, 2
        %s277 = smul.addr %s273, 32
        %s278 = sadd.s32 %s276, %s277
        %s279 = smul.addr %s278, 4
        %s280 = scalar_lea.vmem %s0, %s279
        %s281 = smul.u32 16, %s21
      $region36: #{latlayer_forward.1} parent=31 // pred_fallthru
        _
      // Predicated region
      $region37: #{latlayer_forward.1} parent=31 // pred_check
        %p282 = pneg %p83
      $region38: #{latlayer_forward.1} parent=31 // pred_check_branch
        %284 = sbr.rel (%p282) target = $region40
      $region39: #{latlayer_forward.1} parent=31 // pred_region
        %s285 = smul.u32 %s21, 16
        %s286 = ssub.s32 %s285, 1
        %p287 = scmp.gt.s32.totalorder %s286, 0
        %s288 = scalar_select %p287, %s286, 0
        %p289 = scmp.lt.s32.totalorder %s20, 1
        %s290 = scalar_select %p289, %s20, 1
        %p291 = scmp.lt.s32.totalorder %s288, 15
        %s292 = scalar_select %p291, %s288, 15
        %s293 = smul.addr %s292, 2
        %s294 = smul.addr %s290, 32
        %s295 = sadd.s32 %s293, %s294
        %s296 = smul.addr %s295, 4
        %s297 = scalar_lea.vmem %s1, %s296
        %s298 = smul.u32 %s21, 16
        %s299 = ssub.s32 %s298, 1
        %p300 = scmp.gt.s32.totalorder %s299, 0
        %s301 = scalar_select %p300, %s299, 0
      $region40: #{latlayer_forward.1} parent=31 // pred_fallthru
        _
      // Predicated region
      $region41: #{latlayer_forward.1} parent=31 // pred_check
        %p302 = pneg %p119
      $region42: #{latlayer_forward.1} parent=31 // pred_check_branch
        %304 = sbr.rel (%p302) target = $region44
      $region43: #{latlayer_forward.1} parent=31 // pred_region
        %s305 = sadd.s32 %s21, 1
        %s306 = smul.u32 %s305, 16
        %p307 = scmp.lt.s32.totalorder %s306, 15
        %s308 = scalar_select %p307, %s306, 15
        %p309 = scmp.lt.s32.totalorder %s20, 1
        %s310 = scalar_select %p309, %s20, 1
        %p311 = scmp.lt.s32.totalorder %s308, 15
        %s312 = scalar_select %p311, %s308, 15
        %s313 = smul.addr %s312, 2
        %s314 = smul.addr %s310, 32
        %s315 = sadd.s32 %s313, %s314
        %s316 = smul.addr %s315, 4
        %s317 = scalar_lea.vmem %s2, %s316
        %s318 = sadd.s32 %s21, 1
        %s319 = smul.u32 %s318, 16
        %p320 = scmp.lt.s32.totalorder %s319, 15
        %s321 = scalar_select %p320, %s319, 15
      $region44: #{latlayer_forward.1} parent=31 // pred_fallthru
        _
    $region32: #{latlayer_forward.1} parent=5 // pred_fallthru
      _
    %p322 = scmp.le.s32.totalorder 1, %s13
    %p323 = scmp.lt.s32.totalorder %s13, 3
    %p324 = pnand %p322, %p323
    %p325 = pneg %p324
    // Predicated region
    $region45: #{latlayer_forward.1} parent=5 // pred_check
      _
    $region46: #{latlayer_forward.1} parent=5 // pred_check_branch
      %327 = sbr.rel (%p324) target = $region48
    $region47: #{latlayer_forward.1} parent=5 // pred_region
      %s328 = ssub.s32 %s13, 1
      %s329 = smul.u32 16, %s23
      %p330 = scmp.lt.s32.totalorder %s22, 1
      %s331 = scalar_select %p330, %s22, 1
      %p332 = scmp.lt.s32.totalorder %s329, 15
      %s333 = scalar_select %p332, %s329, 15
      %s334 = smul.addr %s333, 2
      %s335 = smul.addr %s331, 32
      %s336 = sadd.s32 %s334, %s335
      %s337 = smul.addr %s336, 4
      %s338 = scalar_lea.vmem %s0, %s337
      %p339 = pneg %p53
      %p340 = pneg %p50
      %s341 = smul.u32 %s23, 16
      %s342 = ssub.s32 %s341, 1
      %p343 = scmp.gt.s32.totalorder %s342, 0
      %s344 = scalar_select %p343, %s342, 0
      %p345 = scmp.lt.s32.totalorder %s22, 1
      %s346 = scalar_select %p345, %s22, 1
      %p347 = scmp.lt.s32.totalorder %s344, 15
      %s348 = scalar_select %p347, %s344, 15
      %s349 = smul.addr %s348, 2
      %s350 = smul.addr %s346, 32
      %s351 = sadd.s32 %s349, %s350
      %s352 = smul.addr %s351, 4
      %s353 = scalar_lea.vmem %s1, %s352
      %p354 = pneg %p89
      %p355 = pneg %p86
      %s356 = sadd.s32 %s23, 1
      %s357 = smul.u32 %s356, 16
      %p358 = scmp.lt.s32.totalorder %s357, 15
      %s359 = scalar_select %p358, %s357, 15
      %p360 = scmp.lt.s32.totalorder %s22, 1
      %s361 = scalar_select %p360, %s22, 1
      %p362 = scmp.lt.s32.totalorder %s359, 15
      %s363 = scalar_select %p362, %s359, 15
      %s364 = smul.addr %s363, 2
      %s365 = smul.addr %s361, 32
      %s366 = sadd.s32 %s364, %s365
      %s367 = smul.addr %s366, 4
      %s368 = scalar_lea.vmem %s2, %s367
      %p369 = pneg %p125
      %p370 = pneg %p122
      %p371 = pneg %p146
      %p372 = pneg %p143
      %p373 = pneg %p167
      %p374 = pneg %p164
      %p375 = pneg %p188
      %p376 = pneg %p185
      %p377 = pneg %p209
      %p378 = pneg %p206
      %p379 = pneg %p237
      %p380 = pneg %p234
      %s381 = smul.u32 48, %s23
      %p382 = scmp.lt.s32.totalorder %s22, 1
      %s383 = scalar_select %p382, %s22, 1
      %p384 = scmp.lt.s32.totalorder %s381, 47
      %s385 = scalar_select %p384, %s381, 47
      %s386 = smul.addr %s383, 48
      %s387 = sadd.s32 %s385, %s386
      %s388 = smul.addr %s387, 8
      %s389 = scalar_lea.vmem %s7, %s388
      %s390 = smul.u32 16, %s23
      %p391 = scmp.lt.s32.totalorder %s22, 1
      %s392 = scalar_select %p391, %s22, 1
      %p393 = scmp.lt.s32.totalorder %s390, 15
      %s394 = scalar_select %p393, %s390, 15
      %s395 = smul.addr %s394, 2
      %s396 = smul.addr %s392, 32
      %s397 = sadd.s32 %s395, %s396
      %s398 = smul.addr %s397, 4
      %s399 = scalar_lea.vmem %s0, %s398
      %s400 = smul.u32 16, %s23
      %s401 = smul.u32 %s23, 16
      %s402 = ssub.s32 %s401, 1
      %p403 = scmp.gt.s32.totalorder %s402, 0
      %s404 = scalar_select %p403, %s402, 0
      %p405 = scmp.lt.s32.totalorder %s22, 1
      %s406 = scalar_select %p405, %s22, 1
      %p407 = scmp.lt.s32.totalorder %s404, 15
      %s408 = scalar_select %p407, %s404, 15
      %s409 = smul.addr %s408, 2
      %s410 = smul.addr %s406, 32
      %s411 = sadd.s32 %s409, %s410
      %s412 = smul.addr %s411, 4
      %s413 = scalar_lea.vmem %s1, %s412
      %s414 = smul.u32 %s23, 16
      %s415 = ssub.s32 %s414, 1
      %p416 = scmp.gt.s32.totalorder %s415, 0
      %s417 = scalar_select %p416, %s415, 0
      %s418 = sadd.s32 %s23, 1
      %s419 = smul.u32 %s418, 16
      %p420 = scmp.lt.s32.totalorder %s419, 15
      %s421 = scalar_select %p420, %s419, 15
      %p422 = scmp.lt.s32.totalorder %s22, 1
      %s423 = scalar_select %p422, %s22, 1
      %p424 = scmp.lt.s32.totalorder %s421, 15
      %s425 = scalar_select %p424, %s421, 15
      %s426 = smul.addr %s425, 2
      %s427 = smul.addr %s423, 32
      %s428 = sadd.s32 %s426, %s427
      %s429 = smul.addr %s428, 4
      %s430 = scalar_lea.vmem %s2, %s429
      %s431 = sadd.s32 %s23, 1
      %s432 = smul.u32 %s431, 16
      %p433 = scmp.lt.s32.totalorder %s432, 15
      %s434 = scalar_select %p433, %s432, 15
      %s435 = smul.u32 48, %s23
      %p436 = scmp.lt.s32.totalorder %s22, 1
      %s437 = scalar_select %p436, %s22, 1
      %p438 = scmp.lt.s32.totalorder %s435, 47
      %s439 = scalar_select %p438, %s435, 47
      %s440 = smul.addr %s437, 48
      %s441 = sadd.s32 %s439, %s440
      %s442 = smul.addr %s441, 8
      %s443 = scalar_lea.vmem %s7, %s442
      %s444 = smul.u32 48, %s23
      %vm446 = vcmask 516096
      %447 = vst.msk [vmem:[#allocation2] sm:$0x1] %vm446, 0.0
      %448 = vst.msk [vmem:[#allocation2 + $0x18] sm:$0x1] %vm446, 0.0
      %449 = vst.msk [vmem:[#allocation2 + $0x30] sm:$0x1] %vm446, 0.0
      %450 = vst.msk [vmem:[#allocation2 + $0x48] sm:$0x1] %vm446, 0.0
      %451 = vst.msk [vmem:[#allocation2 + $0x60] sm:$0x1] %vm446, 0.0
      %452 = vst.msk [vmem:[#allocation2 + $0x78] sm:$0x1] %vm446, 0.0
      %453 = vst.msk [vmem:[#allocation2 + $0x90] sm:$0x1] %vm446, 0.0
      %454 = vst.msk [vmem:[#allocation2 + $0xa8] sm:$0x1] %vm446, 0.0
      %455 = vst.msk [vmem:[#allocation2 + $0xc0] sm:$0x1] %vm446, 0.0
      %456 = vst.msk [vmem:[#allocation2 + $0xd8] sm:$0x1] %vm446, 0.0
      %457 = vst.msk [vmem:[#allocation2 + $0xf0] sm:$0x1] %vm446, 0.0
      %458 = vst.msk [vmem:[#allocation2 + $0x108] sm:$0x1] %vm446, 0.0
      %459 = vst.msk [vmem:[#allocation2 + $0x120] sm:$0x1] %vm446, 0.0
      %460 = vst.msk [vmem:[#allocation2 + $0x138] sm:$0x1] %vm446, 0.0
      %461 = vst.msk [vmem:[#allocation2 + $0x150] sm:$0x1] %vm446, 0.0
      %462 = vst.msk [vmem:[#allocation2 + $0x168] sm:$0x1] %vm446, 0.0
      %463 = vst.msk [vmem:[#allocation2 + $0x180] sm:$0x1] %vm446, 0.0
      %464 = vst.msk [vmem:[#allocation2 + $0x198] sm:$0x1] %vm446, 0.0
      %465 = vst.msk [vmem:[#allocation2 + $0x1b0] sm:$0x1] %vm446, 0.0
      %vm466 = vcmask 522240
      %467 = vst.msk [vmem:[#allocation2 + $0x11] sm:$0x7f] %vm466, 0.0
      %468 = vst.msk [vmem:[#allocation2 + $0x29] sm:$0x7f] %vm466, 0.0
      %469 = vst.msk [vmem:[#allocation2 + $0x41] sm:$0x7f] %vm466, 0.0
      %470 = vst.msk [vmem:[#allocation2 + $0x59] sm:$0x7f] %vm466, 0.0
      %471 = vst.msk [vmem:[#allocation2 + $0x71] sm:$0x7f] %vm466, 0.0
      %472 = vst.msk [vmem:[#allocation2 + $0x89] sm:$0x7f] %vm466, 0.0
      %473 = vst.msk [vmem:[#allocation2 + $0xa1] sm:$0x7f] %vm466, 0.0
      %474 = vst.msk [vmem:[#allocation2 + $0xb9] sm:$0x7f] %vm466, 0.0
      %475 = vst.msk [vmem:[#allocation2 + $0xd1] sm:$0x7f] %vm466, 0.0
      %476 = vst.msk [vmem:[#allocation2 + $0xe9] sm:$0x7f] %vm466, 0.0
      %477 = vst.msk [vmem:[#allocation2 + $0x101] sm:$0x7f] %vm466, 0.0
      %478 = vst.msk [vmem:[#allocation2 + $0x119] sm:$0x7f] %vm466, 0.0
      %479 = vst.msk [vmem:[#allocation2 + $0x131] sm:$0x7f] %vm466, 0.0
      %480 = vst.msk [vmem:[#allocation2 + $0x149] sm:$0x7f] %vm466, 0.0
      %481 = vst.msk [vmem:[#allocation2 + $0x161] sm:$0x7f] %vm466, 0.0
      %482 = vst.msk [vmem:[#allocation2 + $0x179] sm:$0x7f] %vm466, 0.0
      %483 = vst.msk [vmem:[#allocation2 + $0x191] sm:$0x7f] %vm466, 0.0
      %484 = vst.msk [vmem:[#allocation2 + $0x1a9] sm:$0x7f] %vm466, 0.0
      %485 = vst.msk [vmem:[#allocation2 + $0x1c1] sm:$0x7f] %vm466, 0.0
      %s486 = scalar_lea.vmem [#allocation2], 432
      %vm487 = vcmask 523264
      %488 = vst.msk [vmem:[%s486] sm:$0xff] %vm487, 0.0
      %489 = vst.msk [vmem:[%s486 + $0x8] sm:$0xff] %vm487, 0.0
      %490 = vst.msk [vmem:[%s486 + $0x10] sm:$0xff] %vm487, 0.0
      %v491 = vld [vmem:[%s3] sm:$0xf]
      %v492 = vld [vmem:[%s3 + $0x4] sm:$0xf]
      %v493 = vld [vmem:[%s3 + $0x8] sm:$0xf]
      %v494 = vld [vmem:[%s3 + $0xc] sm:$0xf]
      %v495 = vld [vmem:[%s3 + $0x10] sm:$0x3]
      %v496 = vld [vmem:[%s4] sm:$0x1]
      %v497 = vld [vmem:[%s399] sm:$0xf]
      %v498 = vld [vmem:[%s399 + $0x4] sm:$0xf]
      %v499 = vld [vmem:[%s399 + $0x8] sm:$0xf]
      %v500 = vld [vmem:[%s399 + $0xc] sm:$0xf]
      %v501 = vld [vmem:[%s399 + $0x10] sm:$0xf]
      %v502 = vld [vmem:[%s399 + $0x14] sm:$0xf]
      %v503 = vld [vmem:[%s399 + $0x18] sm:$0xf]
      %v504 = vld [vmem:[%s399 + $0x1c] sm:$0xf]
      %v505 = vld [vmem:[%s399 + $0x20] sm:$0xf]
      %v506 = vld [vmem:[%s399 + $0x24] sm:$0xf]
      %v507 = vld [vmem:[%s399 + $0x28] sm:$0xf]
      %v508 = vld [vmem:[%s399 + $0x2c] sm:$0xf]
      %v509 = vld [vmem:[%s399 + $0x30] sm:$0xf]
      %v510 = vld [vmem:[%s399 + $0x34] sm:$0xf]
      %v511 = vld [vmem:[%s399 + $0x38] sm:$0xf]
      %v512 = vld [vmem:[%s399 + $0x3c] sm:$0xf]
      %v513 = vld [vmem:[%s399 + $0x40] sm:$0xf]
      %v514 = vld [vmem:[%s399 + $0x44] sm:$0xf]
      %v515 = vld [vmem:[%s399 + $0x48] sm:$0xf]
      %v516 = vld [vmem:[%s399 + $0x4c] sm:$0xf]
      %v517 = vld [vmem:[%s399 + $0x50] sm:$0xf]
      %v518 = vld [vmem:[%s399 + $0x54] sm:$0xf]
      %v519 = vld [vmem:[%s399 + $0x58] sm:$0xf]
      %v520 = vld [vmem:[%s399 + $0x5c] sm:$0xf]
      %v521 = vld [vmem:[%s399 + $0x60] sm:$0xf]
      %v522 = vld [vmem:[%s399 + $0x64] sm:$0xf]
      %v523 = vld [vmem:[%s399 + $0x68] sm:$0xf]
      %v524 = vld [vmem:[%s399 + $0x6c] sm:$0xf]
      %v525 = vld [vmem:[%s399 + $0x70] sm:$0xf]
      %v526 = vld [vmem:[%s399 + $0x74] sm:$0xf]
      %v527 = vld [vmem:[%s399 + $0x78] sm:$0xf]
      %v528 = vld [vmem:[%s399 + $0x7c] sm:$0xf]
      %v530 = vlaneseq
      %v531 = vshrl.u32 %v530, 7
      %v532 = vsub.s32 0, %v531
      %v533 = vrot.slane %v496, %v532
      %v567 = vunpack.c.l.b16 %v497
      %v568 = vunpack.c.l.b16 %v498
      %v569 = vunpack.c.l.b16 %v499
      %v570 = vunpack.c.l.b16 %v500
      %v571 = vunpack.c.l.b16 %v501
      %v572 = vunpack.c.l.b16 %v502
      %v573 = vunpack.c.l.b16 %v503
      %v574 = vunpack.c.l.b16 %v504
      %v575 = vunpack.c.l.b16 %v505
      %v576 = vunpack.c.l.b16 %v506
      %v577 = vunpack.c.l.b16 %v507
      %v578 = vunpack.c.l.b16 %v508
      %v579 = vunpack.c.l.b16 %v509
      %v580 = vunpack.c.l.b16 %v510
      %v581 = vunpack.c.l.b16 %v511
      %v582 = vunpack.c.l.b16 %v512
      %v583 = vunpack.c.l.b16 %v513
      %v584 = vunpack.c.l.b16 %v514
      %v585 = vunpack.c.l.b16 %v515
      %v586 = vunpack.c.l.b16 %v516
      %v587 = vunpack.c.l.b16 %v517
      %v588 = vunpack.c.l.b16 %v518
      %v589 = vunpack.c.l.b16 %v519
      %v590 = vunpack.c.l.b16 %v520
      %v591 = vunpack.c.l.b16 %v521
      %v592 = vunpack.c.l.b16 %v522
      %v593 = vunpack.c.l.b16 %v523
      %v594 = vunpack.c.l.b16 %v524
      %v595 = vunpack.c.l.b16 %v525
      %v596 = vunpack.c.l.b16 %v526
      %v597 = vunpack.c.l.b16 %v527
      %v598 = vunpack.c.l.b16 %v528
      %v599 = vpack.c.b16 %v568, %v567
      %v600 = vpack.c.b16 %v570, %v569
      %v601 = vpack.c.b16 %v572, %v571
      %v602 = vpack.c.b16 %v574, %v573
      %v603 = vpack.c.b16 %v576, %v575
      %v604 = vpack.c.b16 %v578, %v577
      %v605 = vpack.c.b16 %v580, %v579
      %v606 = vpack.c.b16 %v582, %v581
      %v607 = vpack.c.b16 %v584, %v583
      %v608 = vpack.c.b16 %v586, %v585
      %v609 = vpack.c.b16 %v588, %v587
      %v610 = vpack.c.b16 %v590, %v589
      %v611 = vpack.c.b16 %v592, %v591
      %v612 = vpack.c.b16 %v594, %v593
      %v613 = vpack.c.b16 %v596, %v595
      %v614 = vpack.c.b16 %v598, %v597
      %v620 = vunpack.c.l.b16 %v491
      %v621 = vunpack.c.l.b16 %v492
      %v622 = vunpack.c.l.b16 %v493
      %v623 = vunpack.c.l.b16 %v494
      %v624 = vunpack.c.l.b16 %v495
      %v625 = vpack.c.b16 %v621, %v620
      %v626 = vpack.c.b16 %v623, %v622
      %v627 = vpack.c.b16 %v624, %v624
      %vm630 = vcmask 293888
      %v632 = vsel %vm630, %v599, 0
      %v635 = vsel %vm630, %v600, 0
      %v638 = vsel %vm630, %v601, 0
      %v641 = vsel %vm630, %v602, 0
      %v644 = vsel %vm630, %v603, 0
      %v647 = vsel %vm630, %v604, 0
      %v650 = vsel %vm630, %v605, 0
      %v653 = vsel %vm630, %v606, 0
      %v656 = vsel %vm630, %v607, 0
      %v659 = vsel %vm630, %v608, 0
      %v662 = vsel %vm630, %v609, 0
      %v665 = vsel %vm630, %v610, 0
      %v668 = vsel %vm630, %v611, 0
      %v671 = vsel %vm630, %v612, 0
      %v674 = vsel %vm630, %v613, 0
      %v677 = vsel %vm630, %v614, 0
      %vm679 = vcmask 1041408
      %v681 = vsel %vm679, %v627, 0
      %683 = vmatprep.subr.bf16.mxu0 0
      %684 = vmatpush1.bf16.msra.mxu0 %v625
      %685 = vmatprep.subr.bf16.mxu0 0
      %686 = vmatpush1.bf16.msra.mxu0 %v626
      %687 = vmatprep.subr.bf16.mxu0 0
      %688 = vmatpush1.bf16.msra.mxu0 %v681
      %689 = vmatprep.subr.bf16.mxu0 0
      %690 = vmatpush1.bf16.msra.mxu0 0
      %691 = vmatprep.subr.bf16.mxu0 0
      %692 = vmatpush1.bf16.msra.mxu0 0
      %693 = vmatprep.subr.bf16.mxu0 0
      %694 = vmatpush1.bf16.msra.mxu0 0
      %695 = vmatprep.subr.bf16.mxu0 0
      %696 = vmatpush1.bf16.msra.mxu0 0
      %697 = vmatprep.subr.bf16.mxu0 0
      %698 = vmatpush1.bf16.msra.mxu0 0
      %699 = vmatprep.subr.bf16.mxu0 0
      %700 = vmatpush1.bf16.msra.mxu0 0
      %701 = vmatprep.subr.bf16.mxu0 0
      %702 = vmatpush1.bf16.msra.mxu0 0
      %703 = vmatprep.subr.bf16.mxu0 0
      %704 = vmatpush1.bf16.msra.mxu0 0
      %705 = vmatprep.subr.bf16.mxu0 0
      %706 = vmatpush1.bf16.msra.mxu0 0
      %707 = vmatprep.subr.bf16.mxu0 0
      %708 = vmatpush1.bf16.msra.mxu0 0
      %709 = vmatprep.subr.bf16.mxu0 0
      %710 = vmatpush1.bf16.msra.mxu0 0
      %711 = vmatprep.subr.bf16.mxu0 0
      %712 = vmatpush1.bf16.msra.mxu0 0
      %713 = vmatprep.subr.bf16.mxu0 0
      %714 = vmatpush1.bf16.msra.mxu0 0
      %715 = vmatprep.mubr.bf16.mxu0 0
      %716 = vmatmul.mubr.bf16.gmra.mrb[0].mxu0 %v632
      %v717 = vpop.f32.mrb[0].mxu0
      %v718 = vadd.f32 %v533, %v717
      %v719 = vpop.f32.mrb[0].mxu0
      %v720 = vpop.f32.mrb[0].mxu0
      %v721 = vadd.f32 %v533, %v720
      %v722 = vpop.f32.mrb[0].mxu0
      %723 = vmatprep.mubr.bf16.mxu0 0
      %724 = vmatmul.mubr.bf16.gmra.mrb[0].mxu0 %v635
      %v725 = vpop.f32.mrb[0].mxu0
      %v726 = vadd.f32 %v533, %v725
      %v727 = vpop.f32.mrb[0].mxu0
      %v728 = vpop.f32.mrb[0].mxu0
      %v729 = vadd.f32 %v533, %v728
      %v730 = vpop.f32.mrb[0].mxu0
      %731 = vmatprep.mubr.bf16.mxu0 0
      %732 = vmatmul.mubr.bf16.gmra.mrb[0].mxu0 %v638
      %v733 = vpop.f32.mrb[0].mxu0
      %v734 = vadd.f32 %v533, %v733
      %v735 = vpop.f32.mrb[0].mxu0
      %v736 = vpop.f32.mrb[0].mxu0
      %v737 = vadd.f32 %v533, %v736
      %v738 = vpop.f32.mrb[0].mxu0
      %739 = vmatprep.mubr.bf16.mxu0 0
      %740 = vmatmul.mubr.bf16.gmra.mrb[0].mxu0 %v641
      %v741 = vpop.f32.mrb[0].mxu0
      %v742 = vadd.f32 %v533, %v741
      %v743 = vpop.f32.mrb[0].mxu0
      %v744 = vpop.f32.mrb[0].mxu0
      %v745 = vadd.f32 %v533, %v744
      %v746 = vpop.f32.mrb[0].mxu0
      %747 = vmatprep.mubr.bf16.mxu0 0
      %748 = vmatmul.mubr.bf16.gmra.mrb[0].mxu0 %v644
      %v749 = vpop.f32.mrb[0].mxu0
      %v750 = vadd.f32 %v533, %v749
      %v751 = vpop.f32.mrb[0].mxu0
      %v752 = vpop.f32.mrb[0].mxu0
      %v753 = vadd.f32 %v533, %v752
      %v754 = vpop.f32.mrb[0].mxu0
      %755 = vmatprep.mubr.bf16.mxu0 0
      %756 = vmatmul.mubr.bf16.gmra.mrb[0].mxu0 %v647
      %v757 = vpop.f32.mrb[0].mxu0
      %v758 = vadd.f32 %v533, %v757
      %v759 = vpop.f32.mrb[0].mxu0
      %v760 = vpop.f32.mrb[0].mxu0
      %v761 = vadd.f32 %v533, %v760
      %v762 = vpop.f32.mrb[0].mxu0
      %763 = vmatprep.mubr.bf16.mxu0 0
      %764 = vmatmul.mubr.bf16.gmra.mrb[0].mxu0 %v650
      %v765 = vpop.f32.mrb[0].mxu0
      %v766 = vadd.f32 %v533, %v765
      %v767 = vpop.f32.mrb[0].mxu0
      %v768 = vpop.f32.mrb[0].mxu0
      %v769 = vadd.f32 %v533, %v768
      %v770 = vpop.f32.mrb[0].mxu0
      %771 = vmatprep.mubr.bf16.mxu0 0
      %772 = vmatmul.mubr.bf16.gmra.mrb[0].mxu0 %v653
      %v773 = vpop.f32.mrb[0].mxu0
      %v774 = vadd.f32 %v533, %v773
      %v775 = vpop.f32.mrb[0].mxu0
      %v776 = vpop.f32.mrb[0].mxu0
      %v777 = vadd.f32 %v533, %v776
      %v778 = vpop.f32.mrb[0].mxu0
      %779 = vmatprep.mubr.bf16.mxu0 0
      %780 = vmatmul.mubr.bf16.gmra.mrb[0].mxu0 %v656
      %v781 = vpop.f32.mrb[0].mxu0
      %v782 = vadd.f32 %v533, %v781
      %v783 = vpop.f32.mrb[0].mxu0
      %v784 = vpop.f32.mrb[0].mxu0
      %v785 = vadd.f32 %v533, %v784
      %v786 = vpop.f32.mrb[0].mxu0
      %787 = vmatprep.mubr.bf16.mxu0 0
      %788 = vmatmul.mubr.bf16.gmra.mrb[0].mxu0 %v659
      %v789 = vpop.f32.mrb[0].mxu0
      %v790 = vadd.f32 %v533, %v789
      %v791 = vpop.f32.mrb[0].mxu0
      %v792 = vpop.f32.mrb[0].mxu0
      %v793 = vadd.f32 %v533, %v792
      %v794 = vpop.f32.mrb[0].mxu0
      %795 = vmatprep.mubr.bf16.mxu0 0
      %796 = vmatmul.mubr.bf16.gmra.mrb[0].mxu0 %v662
      %v797 = vpop.f32.mrb[0].mxu0
      %v798 = vadd.f32 %v533, %v797
      %v799 = vpop.f32.mrb[0].mxu0
      %v800 = vpop.f32.mrb[0].mxu0
      %v801 = vadd.f32 %v533, %v800
      %v802 = vpop.f32.mrb[0].mxu0
      %803 = vmatprep.mubr.bf16.mxu0 0
      %804 = vmatmul.mubr.bf16.gmra.mrb[0].mxu0 %v665
      %v805 = vpop.f32.mrb[0].mxu0
      %v806 = vadd.f32 %v533, %v805
      %v807 = vpop.f32.mrb[0].mxu0
      %v808 = vpop.f32.mrb[0].mxu0
      %v809 = vadd.f32 %v533, %v808
      %v810 = vpop.f32.mrb[0].mxu0
      %811 = vmatprep.mubr.bf16.mxu0 0
      %812 = vmatmul.mubr.bf16.gmra.mrb[0].mxu0 %v668
      %v813 = vpop.f32.mrb[0].mxu0
      %v814 = vadd.f32 %v533, %v813
      %v815 = vpop.f32.mrb[0].mxu0
      %v816 = vpop.f32.mrb[0].mxu0
      %v817 = vadd.f32 %v533, %v816
      %v818 = vpop.f32.mrb[0].mxu0
      %819 = vmatprep.mubr.bf16.mxu0 0
      %820 = vmatmul.mubr.bf16.gmra.mrb[0].mxu0 %v671
      %v821 = vpop.f32.mrb[0].mxu0
      %v822 = vadd.f32 %v533, %v821
      %v823 = vpop.f32.mrb[0].mxu0
      %v824 = vpop.f32.mrb[0].mxu0
      %v825 = vadd.f32 %v533, %v824
      %v826 = vpop.f32.mrb[0].mxu0
      %827 = vmatprep.mubr.bf16.mxu0 0
      %828 = vmatmul.mubr.bf16.gmra.mrb[0].mxu0 %v674
      %v829 = vpop.f32.mrb[0].mxu0
      %v830 = vadd.f32 %v533, %v829
      %v831 = vpop.f32.mrb[0].mxu0
      %v832 = vpop.f32.mrb[0].mxu0
      %v833 = vadd.f32 %v533, %v832
      %v834 = vpop.f32.mrb[0].mxu0
      %835 = vmatprep.mubr.bf16.mxu0 0
      %836 = vmatmul.mubr.bf16.gmra.mrb[0].mxu0 %v677
      %v837 = vpop.f32.mrb[0].mxu0
      %v838 = vadd.f32 %v533, %v837
      %v839 = vpop.f32.mrb[0].mxu0
      %v840 = vpop.f32.mrb[0].mxu0
      %v841 = vadd.f32 %v533, %v840
      %v842 = vpop.f32.mrb[0].mxu0
      %843 = vdwg.mxu0
      %v844 = vmax.f32 %v718, 0.0
      %v845 = vmax.f32 %v721, 0.0
      %v846 = vmax.f32 %v726, 0.0
      %v847 = vmax.f32 %v729, 0.0
      %v848 = vmax.f32 %v734, 0.0
      %v849 = vmax.f32 %v737, 0.0
      %v850 = vmax.f32 %v742, 0.0
      %v851 = vmax.f32 %v745, 0.0
      %v852 = vmax.f32 %v750, 0.0
      %v853 = vmax.f32 %v753, 0.0
      %v854 = vmax.f32 %v758, 0.0
      %v855 = vmax.f32 %v761, 0.0
      %v856 = vmax.f32 %v766, 0.0
      %v857 = vmax.f32 %v769, 0.0
      %v858 = vmax.f32 %v774, 0.0
      %v859 = vmax.f32 %v777, 0.0
      %v860 = vmax.f32 %v782, 0.0
      %v861 = vmax.f32 %v785, 0.0
      %v862 = vmax.f32 %v790, 0.0
      %v863 = vmax.f32 %v793, 0.0
      %v864 = vmax.f32 %v798, 0.0
      %v865 = vmax.f32 %v801, 0.0
      %v866 = vmax.f32 %v806, 0.0
      %v867 = vmax.f32 %v809, 0.0
      %v868 = vmax.f32 %v814, 0.0
      %v869 = vmax.f32 %v817, 0.0
      %v870 = vmax.f32 %v822, 0.0
      %v871 = vmax.f32 %v825, 0.0
      %v872 = vmax.f32 %v830, 0.0
      %v873 = vmax.f32 %v833, 0.0
      %v874 = vmax.f32 %v838, 0.0
      %v875 = vmax.f32 %v841, 0.0
      %s876 = scalar_lea.vmem [#allocation2], 24
      %877 = vst.msk [vmem:[%s876 + $0x1] sm:$0xff] %vm487, %v844
      %878 = vst.msk [vmem:[%s876 + $0x9] sm:$0xff] %vm487, %v845
      %879 = vst.msk [vmem:[%s876 + $0x19] sm:$0xff] %vm487, %v846
      %880 = vst.msk [vmem:[%s876 + $0x21] sm:$0xff] %vm487, %v847
      %881 = vst.msk [vmem:[%s876 + $0x31] sm:$0xff] %vm487, %v848
      %882 = vst.msk [vmem:[%s876 + $0x39] sm:$0xff] %vm487, %v849
      %883 = vst.msk [vmem:[%s876 + $0x49] sm:$0xff] %vm487, %v850
      %884 = vst.msk [vmem:[%s876 + $0x51] sm:$0xff] %vm487, %v851
      %885 = vst.msk [vmem:[%s876 + $0x61] sm:$0xff] %vm487, %v852
      %886 = vst.msk [vmem:[%s876 + $0x69] sm:$0xff] %vm487, %v853
      %887 = vst.msk [vmem:[%s876 + $0x79] sm:$0xff] %vm487, %v854
      %888 = vst.msk [vmem:[%s876 + $0x81] sm:$0xff] %vm487, %v855
      %889 = vst.msk [vmem:[%s876 + $0x91] sm:$0xff] %vm487, %v856
      %890 = vst.msk [vmem:[%s876 + $0x99] sm:$0xff] %vm487, %v857
      %891 = vst.msk [vmem:[%s876 + $0xa9] sm:$0xff] %vm487, %v858
      %892 = vst.msk [vmem:[%s876 + $0xb1] sm:$0xff] %vm487, %v859
      %893 = vst.msk [vmem:[%s876 + $0xc1] sm:$0xff] %vm487, %v860
      %894 = vst.msk [vmem:[%s876 + $0xc9] sm:$0xff] %vm487, %v861
      %895 = vst.msk [vmem:[%s876 + $0xd9] sm:$0xff] %vm487, %v862
      %896 = vst.msk [vmem:[%s876 + $0xe1] sm:$0xff] %vm487, %v863
      %897 = vst.msk [vmem:[%s876 + $0xf1] sm:$0xff] %vm487, %v864
      %898 = vst.msk [vmem:[%s876 + $0xf9] sm:$0xff] %vm487, %v865
      %899 = vst.msk [vmem:[%s876 + $0x109] sm:$0xff] %vm487, %v866
      %900 = vst.msk [vmem:[%s876 + $0x111] sm:$0xff] %vm487, %v867
      %901 = vst.msk [vmem:[%s876 + $0x121] sm:$0xff] %vm487, %v868
      %902 = vst.msk [vmem:[%s876 + $0x129] sm:$0xff] %vm487, %v869
      %903 = vst.msk [vmem:[%s876 + $0x139] sm:$0xff] %vm487, %v870
      %904 = vst.msk [vmem:[%s876 + $0x141] sm:$0xff] %vm487, %v871
      %905 = vst.msk [vmem:[%s876 + $0x151] sm:$0xff] %vm487, %v872
      %906 = vst.msk [vmem:[%s876 + $0x159] sm:$0xff] %vm487, %v873
      %907 = vst.msk [vmem:[%s876 + $0x169] sm:$0xff] %vm487, %v874
      %908 = vst.msk [vmem:[%s876 + $0x171] sm:$0xff] %vm487, %v875
      %v909 = vld [vmem:[%s413] sm:$0xf]
      %v910 = vld [vmem:[%s413 + $0x4] sm:$0xf]
      %p911 = scmp.gt.s32.totalorder %s23, 0
      %v914 = vunpack.c.l.b16 %v909
      %v915 = vunpack.c.l.b16 %v910
      %v916 = vpack.c.b16 %v915, %v914
      %v918 = vsel %vm630, %v916, 0
      %920 = vmatprep.subr.bf16.mxu0 0
      %921 = vmatpush1.bf16.msra.mxu0 %v625
      %922 = vmatprep.subr.bf16.mxu0 0
      %923 = vmatpush1.bf16.msra.mxu0 %v626
      %924 = vmatprep.subr.bf16.mxu0 0
      %925 = vmatpush1.bf16.msra.mxu0 %v681
      %926 = vmatprep.subr.bf16.mxu0 0
      %927 = vmatpush1.bf16.msra.mxu0 0
      %928 = vmatprep.subr.bf16.mxu0 0
      %929 = vmatpush1.bf16.msra.mxu0 0
      %930 = vmatprep.subr.bf16.mxu0 0
      %931 = vmatpush1.bf16.msra.mxu0 0
      %932 = vmatprep.subr.bf16.mxu0 0
      %933 = vmatpush1.bf16.msra.mxu0 0
      %934 = vmatprep.subr.bf16.mxu0 0
      %935 = vmatpush1.bf16.msra.mxu0 0
      %936 = vmatprep.subr.bf16.mxu0 0
      %937 = vmatpush1.bf16.msra.mxu0 0
      %938 = vmatprep.subr.bf16.mxu0 0
      %939 = vmatpush1.bf16.msra.mxu0 0
      %940 = vmatprep.subr.bf16.mxu0 0
      %941 = vmatpush1.bf16.msra.mxu0 0
      %942 = vmatprep.subr.bf16.mxu0 0
      %943 = vmatpush1.bf16.msra.mxu0 0
      %944 = vmatprep.subr.bf16.mxu0 0
      %945 = vmatpush1.bf16.msra.mxu0 0
      %946 = vmatprep.subr.bf16.mxu0 0
      %947 = vmatpush1.bf16.msra.mxu0 0
      %948 = vmatprep.subr.bf16.mxu0 0
      %949 = vmatpush1.bf16.msra.mxu0 0
      %950 = vmatprep.subr.bf16.mxu0 0
      %951 = vmatpush1.bf16.msra.mxu0 0
      %952 = vmatprep.mubr.bf16.mxu0 0
      %953 = vmatmul.mubr.bf16.gmra.mrb[0].mxu0 %v918
      %v954 = vpop.f32.mrb[0].mxu0
      %v955 = vadd.f32 %v533, %v954
      %v956 = vpop.f32.mrb[0].mxu0
      %v957 = vpop.f32.mrb[0].mxu0
      %v958 = vadd.f32 %v533, %v957
      %v959 = vpop.f32.mrb[0].mxu0
      %960 = vdwg.mxu0
      %v961 = vmax.f32 %v955, 0.0
      %v962 = vmax.f32 %v958, 0.0
      %s963 = scalar_select %p911, 1, 0
      %v964 = vstv %s963
      %vm965 = vcmp.eq.s32.totalorder %v964, 1
      %v966 = vsel %vm965, %v961, 0.0
      %v967 = vsel %vm965, %v962, 0.0
      %968 = vst.msk [vmem:[#allocation2 + $0x1] sm:$0xff] %vm487, %v966
      %969 = vst.msk [vmem:[#allocation2 + $0x9] sm:$0xff] %vm487, %v967
      %v970 = vld [vmem:[%s430] sm:$0xf]
      %v971 = vld [vmem:[%s430 + $0x4] sm:$0xf]
      %p972 = scmp.lt.s32.totalorder %s23, 0
      %v975 = vunpack.c.l.b16 %v970
      %v976 = vunpack.c.l.b16 %v971
      %v977 = vpack.c.b16 %v976, %v975
      %v979 = vsel %vm630, %v977, 0
      %981 = vmatprep.subr.bf16.mxu0 0
      %982 = vmatpush1.bf16.msra.mxu0 %v625
      %983 = vmatprep.subr.bf16.mxu0 0
      %984 = vmatpush1.bf16.msra.mxu0 %v626
      %985 = vmatprep.subr.bf16.mxu0 0
      %986 = vmatpush1.bf16.msra.mxu0 %v681
      %987 = vmatprep.subr.bf16.mxu0 0
      %988 = vmatpush1.bf16.msra.mxu0 0
      %989 = vmatprep.subr.bf16.mxu0 0
      %990 = vmatpush1.bf16.msra.mxu0 0
      %991 = vmatprep.subr.bf16.mxu0 0
      %992 = vmatpush1.bf16.msra.mxu0 0
      %993 = vmatprep.subr.bf16.mxu0 0
      %994 = vmatpush1.bf16.msra.mxu0 0
      %995 = vmatprep.subr.bf16.mxu0 0
      %996 = vmatpush1.bf16.msra.mxu0 0
      %997 = vmatprep.subr.bf16.mxu0 0
      %998 = vmatpush1.bf16.msra.mxu0 0
      %999 = vmatprep.subr.bf16.mxu0 0
      %1000 = vmatpush1.bf16.msra.mxu0 0
      %1001 = vmatprep.subr.bf16.mxu0 0
      %1002 = vmatpush1.bf16.msra.mxu0 0
      %1003 = vmatprep.subr.bf16.mxu0 0
      %1004 = vmatpush1.bf16.msra.mxu0 0
      %1005 = vmatprep.subr.bf16.mxu0 0
      %1006 = vmatpush1.bf16.msra.mxu0 0
      %1007 = vmatprep.subr.bf16.mxu0 0
      %1008 = vmatpush1.bf16.msra.mxu0 0
      %1009 = vmatprep.subr.bf16.mxu0 0
      %1010 = vmatpush1.bf16.msra.mxu0 0
      %1011 = vmatprep.subr.bf16.mxu0 0
      %1012 = vmatpush1.bf16.msra.mxu0 0
      %1013 = vmatprep.mubr.bf16.mxu0 0
      %1014 = vmatmul.mubr.bf16.gmra.mrb[0].mxu0 %v979
      %v1015 = vpop.f32.mrb[0].mxu0
      %v1016 = vadd.f32 %v533, %v1015
      %v1017 = vpop.f32.mrb[0].mxu0
      %v1018 = vpop.f32.mrb[0].mxu0
      %v1019 = vadd.f32 %v533, %v1018
      %v1020 = vpop.f32.mrb[0].mxu0
      %1021 = vdwg.mxu0
      %v1022 = vmax.f32 %v1016, 0.0
      %v1023 = vmax.f32 %v1019, 0.0
      %s1024 = scalar_select %p972, 1, 0
      %v1025 = vstv %s1024
      %vm1026 = vcmp.eq.s32.totalorder %v1025, 1
      %v1027 = vsel %vm1026, %v1022, 0.0
      %v1028 = vsel %vm1026, %v1023, 0.0
      %s1029 = scalar_lea.vmem [#allocation2], 408
      %1030 = vst.msk [vmem:[%s1029 + $0x1] sm:$0xff] %vm487, %v1027
      %1031 = vst.msk [vmem:[%s1029 + $0x9] sm:$0xff] %vm487, %v1028
      %v1032 = vld [vmem:[#allocation2] sm:$0xff]
      %v1033 = vld [vmem:[#allocation2 + $0x8] sm:$0xff]
      %v1034 = vld [vmem:[#allocation2 + $0x10] sm:$0xff]
      %v1035 = vld [vmem:[#allocation2 + $0x18] sm:$0xff]
      %v1036 = vld [vmem:[#allocation2 + $0x20] sm:$0xff]
      %v1037 = vld [vmem:[#allocation2 + $0x28] sm:$0xff]
      %v1038 = vld [vmem:[#allocation2 + $0x30] sm:$0xff]
      %v1039 = vld [vmem:[#allocation2 + $0x38] sm:$0xff]
      %v1040 = vld [vmem:[#allocation2 + $0x40] sm:$0xff]
      %v1041 = vld [vmem:[#allocation2 + $0x48] sm:$0xff]
      %v1042 = vld [vmem:[#allocation2 + $0x50] sm:$0xff]
      %v1043 = vld [vmem:[#allocation2 + $0x58] sm:$0xff]
      %v1044 = vld [vmem:[#allocation2 + $0x60] sm:$0xff]
      %v1045 = vld [vmem:[#allocation2 + $0x68] sm:$0xff]
      %v1046 = vld [vmem:[#allocation2 + $0x70] sm:$0xff]
      %v1047 = vld [vmem:[#allocation2 + $0x78] sm:$0xff]
      %v1048 = vld [vmem:[#allocation2 + $0x80] sm:$0xff]
      %v1049 = vld [vmem:[#allocation2 + $0x88] sm:$0xff]
      %v1050 = vld [vmem:[#allocation2 + $0x90] sm:$0xff]
      %v1051 = vld [vmem:[#allocation2 + $0x98] sm:$0xff]
      %v1052 = vld [vmem:[#allocation2 + $0xa0] sm:$0xff]
      %v1053 = vld [vmem:[#allocation2 + $0xa8] sm:$0xff]
      %v1054 = vld [vmem:[#allocation2 + $0xb0] sm:$0xff]
      %v1055 = vld [vmem:[#allocation2 + $0xb8] sm:$0xff]
      %v1056 = vld [vmem:[#allocation2 + $0xc0] sm:$0xff]
      %v1057 = vld [vmem:[#allocation2 + $0xc8] sm:$0xff]
      %v1058 = vld [vmem:[#allocation2 + $0xd0] sm:$0xff]
      %v1059 = vld [vmem:[#allocation2 + $0xd8] sm:$0xff]
      %v1060 = vld [vmem:[#allocation2 + $0xe0] sm:$0xff]
      %v1061 = vld [vmem:[#allocation2 + $0xe8] sm:$0xff]
      %v1062 = vld [vmem:[#allocation2 + $0xf0] sm:$0xff]
      %v1063 = vld [vmem:[#allocation2 + $0xf8] sm:$0xff]
      %v1064 = vld [vmem:[#allocation2 + $0x100] sm:$0xff]
      %v1065 = vld [vmem:[#allocation2 + $0x108] sm:$0xff]
      %v1066 = vld [vmem:[#allocation2 + $0x110] sm:$0xff]
      %v1067 = vld [vmem:[#allocation2 + $0x118] sm:$0xff]
      %v1068 = vld [vmem:[#allocation2 + $0x120] sm:$0xff]
      %v1069 = vld [vmem:[#allocation2 + $0x128] sm:$0xff]
      %v1070 = vld [vmem:[#allocation2 + $0x130] sm:$0xff]
      %v1071 = vld [vmem:[#allocation2 + $0x138] sm:$0xff]
      %v1072 = vld [vmem:[#allocation2 + $0x140] sm:$0xff]
      %v1073 = vld [vmem:[#allocation2 + $0x148] sm:$0xff]
      %v1074 = vld [vmem:[#allocation2 + $0x150] sm:$0xff]
      %v1075 = vld [vmem:[#allocation2 + $0x158] sm:$0xff]
      %v1076 = vld [vmem:[#allocation2 + $0x160] sm:$0xff]
      %v1077 = vld [vmem:[#allocation2 + $0x168] sm:$0xff]
      %v1078 = vld [vmem:[#allocation2 + $0x170] sm:$0xff]
      %v1079 = vld [vmem:[#allocation2 + $0x178] sm:$0xff]
      %v1080 = vld [vmem:[#allocation2 + $0x180] sm:$0xff]
      %v1081 = vld [vmem:[#allocation2 + $0x188] sm:$0xff]
      %v1082 = vld [vmem:[#allocation2 + $0x190] sm:$0xff]
      %v1083 = vld [vmem:[#allocation2 + $0x198] sm:$0xff]
      %v1084 = vld [vmem:[#allocation2 + $0x1a0] sm:$0xff]
      %v1085 = vld [vmem:[#allocation2 + $0x1a8] sm:$0xff]
      %v1086 = vld [vmem:[#allocation2 + $0x1b0] sm:$0xff]
      %v1087 = vld [vmem:[%s5] sm:$0xf]
      %v1088 = vld [vmem:[%s5 + $0x4] sm:$0xf]
      %v1089 = vld [vmem:[%s5 + $0x8] sm:$0xf]
      %v1090 = vld [vmem:[%s5 + $0xc] sm:$0xf]
      %v1091 = vld [vmem:[%s5 + $0x10] sm:$0xf]
      %v1092 = vld [vmem:[%s5 + $0x14] sm:$0xf]
      %v1093 = vld [vmem:[%s5 + $0x18] sm:$0xf]
      %v1094 = vld [vmem:[%s5 + $0x1c] sm:$0xf]
      %v1095 = vld [vmem:[%s5 + $0x20] sm:$0xf]
      %v1096 = vld [vmem:[%s5 + $0x24] sm:$0xf]
      %v1097 = vld [vmem:[%s5 + $0x28] sm:$0xf]
      %v1098 = vld [vmem:[%s5 + $0x2c] sm:$0xf]
      %v1099 = vld [vmem:[%s5 + $0x30] sm:$0xf]
      %v1100 = vld [vmem:[%s5 + $0x34] sm:$0xf]
      %v1101 = vld [vmem:[%s5 + $0x38] sm:$0xf]
      %v1102 = vld [vmem:[%s5 + $0x3c] sm:$0xf]
      %v1103 = vld [vmem:[%s5 + $0x40] sm:$0xf]
      %v1104 = vld [vmem:[%s5 + $0x44] sm:$0xf]
      %v1105 = vld [vmem:[%s5 + $0x48] sm:$0xf]
      %v1106 = vld [vmem:[%s5 + $0x4c] sm:$0xf]
      %v1107 = vld [vmem:[%s5 + $0x50] sm:$0xf]
      %v1108 = vld [vmem:[%s5 + $0x54] sm:$0xf]
      %v1109 = vld [vmem:[%s5 + $0x58] sm:$0xf]
      %v1110 = vld [vmem:[%s5 + $0x5c] sm:$0xf]
      %v1111 = vld [vmem:[%s5 + $0x60] sm:$0xf]
      %v1112 = vld [vmem:[%s5 + $0x64] sm:$0xf]
      %v1113 = vld [vmem:[%s5 + $0x68] sm:$0xf]
      %v1114 = vld [vmem:[%s5 + $0x6c] sm:$0xf]
      %v1115 = vld [vmem:[%s5 + $0x70] sm:$0xf]
      %v1116 = vld [vmem:[%s5 + $0x74] sm:$0xf]
      %v1117 = vld [vmem:[%s5 + $0x78] sm:$0xf]
      %v1118 = vld [vmem:[%s5 + $0x7c] sm:$0xf]
      %v1119 = vld [vmem:[%s5 + $0x80] sm:$0xf]
      %v1120 = vld [vmem:[%s5 + $0x84] sm:$0xf]
      %v1121 = vld [vmem:[%s5 + $0x88] sm:$0xf]
      %v1122 = vld [vmem:[%s5 + $0x8c] sm:$0xf]
      %v1123 = vld [vmem:[%s5 + $0x90] sm:$0xf]
      %v1124 = vld [vmem:[%s5 + $0x94] sm:$0xf]
      %v1125 = vld [vmem:[%s5 + $0x98] sm:$0xf]
      %v1126 = vld [vmem:[%s5 + $0x9c] sm:$0xf]
      %v1127 = vld [vmem:[%s5 + $0xa0] sm:$0xf]
      %v1128 = vld [vmem:[%s5 + $0xa4] sm:$0xf]
      %v1129 = vld [vmem:[%s5 + $0xa8] sm:$0xf]
      %v1130 = vld [vmem:[%s5 + $0xac] sm:$0xf]
      %v1131 = vld [vmem:[%s5 + $0xb0] sm:$0xf]
      %v1132 = vld [vmem:[%s5 + $0xb4] sm:$0xf]
      %v1133 = vld [vmem:[%s5 + $0xb8] sm:$0xf]
      %v1134 = vld [vmem:[%s5 + $0xbc] sm:$0xf]
      %v1135 = vld [vmem:[%s5 + $0xc0] sm:$0xf]
      %v1136 = vld [vmem:[%s5 + $0xc4] sm:$0xf]
      %v1137 = vld [vmem:[%s5 + $0xc8] sm:$0xf]
      %v1138 = vld [vmem:[%s5 + $0xcc] sm:$0xf]
      %v1139 = vld [vmem:[%s5 + $0xd0] sm:$0xf]
      %v1140 = vld [vmem:[%s5 + $0xd4] sm:$0xf]
      %v1141 = vld [vmem:[%s5 + $0xd8] sm:$0xf]
      %v1142 = vld [vmem:[%s5 + $0xdc] sm:$0xf]
      %v1143 = vld [vmem:[%s5 + $0xe0] sm:$0xf]
      %v1144 = vld [vmem:[%s5 + $0xe4] sm:$0xf]
      %v1145 = vld [vmem:[%s5 + $0xe8] sm:$0xf]
      %v1146 = vld [vmem:[%s5 + $0xec] sm:$0xf]
      %v1147 = vld [vmem:[%s5 + $0xf0] sm:$0xf]
      %v1148 = vld [vmem:[%s5 + $0xf4] sm:$0xf]
      %v1149 = vld [vmem:[%s5 + $0xf8] sm:$0xf]
      %v1150 = vld [vmem:[%s5 + $0xfc] sm:$0xf]
      %v1151 = vld [vmem:[%s5 + $0x100] sm:$0xf]
      %v1152 = vld [vmem:[%s5 + $0x104] sm:$0xf]
      %v1153 = vld [vmem:[%s5 + $0x108] sm:$0xf]
      %v1154 = vld [vmem:[%s5 + $0x10c] sm:$0xf]
      %v1155 = vld [vmem:[%s5 + $0x110] sm:$0xf]
      %v1156 = vld [vmem:[%s5 + $0x114] sm:$0xf]
      %v1157 = vld [vmem:[%s5 + $0x118] sm:$0xf]
      %v1158 = vld [vmem:[%s5 + $0x11c] sm:$0xf]
      %vm1208 = vcmask 1046528
      %v1209 = vrot.slane %v1032, 1
      %v1210 = vrot.slane %v1033, 1
      %v1211 = vsel %vm1208, %v1209, %v1210
      %v1212 = vrot.slane %v1034, 1
      %v1213 = vsel %vm1208, %v1210, %v1212
      %v1214 = vrot.slane %v1035, 1
      %v1215 = vsel %vm1208, %v1212, %v1214
      %v1216 = vrot.slane %v1036, 1
      %v1217 = vsel %vm1208, %v1214, %v1216
      %v1218 = vrot.slane %v1037, 1
      %v1219 = vsel %vm1208, %v1216, %v1218
      %v1220 = vrot.slane %v1038, 1
      %v1221 = vsel %vm1208, %v1218, %v1220
      %v1222 = vrot.slane %v1039, 1
      %v1223 = vsel %vm1208, %v1220, %v1222
      %v1224 = vrot.slane %v1040, 1
      %v1225 = vsel %vm1208, %v1222, %v1224
      %v1226 = vrot.slane %v1041, 1
      %v1227 = vsel %vm1208, %v1224, %v1226
      %v1228 = vrot.slane %v1042, 1
      %v1229 = vsel %vm1208, %v1226, %v1228
      %v1230 = vrot.slane %v1043, 1
      %v1231 = vsel %vm1208, %v1228, %v1230
      %v1232 = vrot.slane %v1044, 1
      %v1233 = vsel %vm1208, %v1230, %v1232
      %v1234 = vrot.slane %v1045, 1
      %v1235 = vsel %vm1208, %v1232, %v1234
      %v1236 = vrot.slane %v1046, 1
      %v1237 = vsel %vm1208, %v1234, %v1236
      %v1238 = vrot.slane %v1047, 1
      %v1239 = vsel %vm1208, %v1236, %v1238
      %v1240 = vrot.slane %v1048, 1
      %v1241 = vsel %vm1208, %v1238, %v1240
      %v1242 = vrot.slane %v1049, 1
      %v1243 = vsel %vm1208, %v1240, %v1242
      %v1244 = vrot.slane %v1050, 1
      %v1245 = vsel %vm1208, %v1242, %v1244
      %v1246 = vrot.slane %v1051, 1
      %v1247 = vsel %vm1208, %v1244, %v1246
      %v1248 = vrot.slane %v1052, 1
      %v1249 = vsel %vm1208, %v1246, %v1248
      %v1250 = vrot.slane %v1053, 1
      %v1251 = vsel %vm1208, %v1248, %v1250
      %v1252 = vrot.slane %v1054, 1
      %v1253 = vsel %vm1208, %v1250, %v1252
      %v1254 = vrot.slane %v1055, 1
      %v1255 = vsel %vm1208, %v1252, %v1254
      %v1256 = vrot.slane %v1056, 1
      %v1257 = vsel %vm1208, %v1254, %v1256
      %v1258 = vrot.slane %v1057, 1
      %v1259 = vsel %vm1208, %v1256, %v1258
      %v1260 = vrot.slane %v1058, 1
      %v1261 = vsel %vm1208, %v1258, %v1260
      %v1262 = vrot.slane %v1059, 1
      %v1263 = vsel %vm1208, %v1260, %v1262
      %v1264 = vrot.slane %v1060, 1
      %v1265 = vsel %vm1208, %v1262, %v1264
      %v1266 = vrot.slane %v1061, 1
      %v1267 = vsel %vm1208, %v1264, %v1266
      %v1268 = vrot.slane %v1062, 1
      %v1269 = vsel %vm1208, %v1266, %v1268
      %v1270 = vrot.slane %v1063, 1
      %v1271 = vsel %vm1208, %v1268, %v1270
      %v1272 = vrot.slane %v1064, 1
      %v1273 = vsel %vm1208, %v1270, %v1272
      %v1274 = vrot.slane %v1065, 1
      %v1275 = vsel %vm1208, %v1272, %v1274
      %v1276 = vrot.slane %v1066, 1
      %v1277 = vsel %vm1208, %v1274, %v1276
      %v1278 = vrot.slane %v1067, 1
      %v1279 = vsel %vm1208, %v1276, %v1278
      %v1280 = vrot.slane %v1068, 1
      %v1281 = vsel %vm1208, %v1278, %v1280
      %v1282 = vrot.slane %v1069, 1
      %v1283 = vsel %vm1208, %v1280, %v1282
      %v1284 = vrot.slane %v1070, 1
      %v1285 = vsel %vm1208, %v1282, %v1284
      %v1286 = vrot.slane %v1071, 1
      %v1287 = vsel %vm1208, %v1284, %v1286
      %v1288 = vrot.slane %v1072, 1
      %v1289 = vsel %vm1208, %v1286, %v1288
      %v1290 = vrot.slane %v1073, 1
      %v1291 = vsel %vm1208, %v1288, %v1290
      %v1292 = vrot.slane %v1074, 1
      %v1293 = vsel %vm1208, %v1290, %v1292
      %v1294 = vrot.slane %v1075, 1
      %v1295 = vsel %vm1208, %v1292, %v1294
      %v1296 = vrot.slane %v1076, 1
      %v1297 = vsel %vm1208, %v1294, %v1296
      %v1298 = vrot.slane %v1077, 1
      %v1299 = vsel %vm1208, %v1296, %v1298
      %v1300 = vrot.slane %v1078, 1
      %v1301 = vsel %vm1208, %v1298, %v1300
      %v1302 = vrot.slane %v1079, 1
      %v1303 = vsel %vm1208, %v1300, %v1302
      %v1304 = vrot.slane %v1080, 1
      %v1305 = vsel %vm1208, %v1302, %v1304
      %1306 = vrot.lane.b32.xlu0 %v1211, 64
      %v1307 = vpop.permute.xlu0 %1306
      %1308 = vrot.lane.b32.xlu0 %v1213, 64
      %v1309 = vpop.permute.xlu0 %1308
      %1310 = vrot.lane.b32.xlu0 %v1215, 64
      %v1311 = vpop.permute.xlu0 %1310
      %1312 = vrot.lane.b32.xlu0 %v1217, 64
      %v1313 = vpop.permute.xlu0 %1312
      %1314 = vrot.lane.b32.xlu0 %v1219, 64
      %v1315 = vpop.permute.xlu0 %1314
      %1316 = vrot.lane.b32.xlu0 %v1221, 64
      %v1317 = vpop.permute.xlu0 %1316
      %1318 = vrot.lane.b32.xlu0 %v1223, 64
      %v1319 = vpop.permute.xlu0 %1318
      %1320 = vrot.lane.b32.xlu0 %v1225, 64
      %v1321 = vpop.permute.xlu0 %1320
      %1322 = vrot.lane.b32.xlu0 %v1227, 64
      %v1323 = vpop.permute.xlu0 %1322
      %1324 = vrot.lane.b32.xlu0 %v1229, 64
      %v1325 = vpop.permute.xlu0 %1324
      %1326 = vrot.lane.b32.xlu0 %v1231, 64
      %v1327 = vpop.permute.xlu0 %1326
      %1328 = vrot.lane.b32.xlu0 %v1233, 64
      %v1329 = vpop.permute.xlu0 %1328
      %1330 = vrot.lane.b32.xlu0 %v1235, 64
      %v1331 = vpop.permute.xlu0 %1330
      %1332 = vrot.lane.b32.xlu0 %v1237, 64
      %v1333 = vpop.permute.xlu0 %1332
      %1334 = vrot.lane.b32.xlu0 %v1239, 64
      %v1335 = vpop.permute.xlu0 %1334
      %1336 = vrot.lane.b32.xlu0 %v1241, 64
      %v1337 = vpop.permute.xlu0 %1336
      %1338 = vrot.lane.b32.xlu0 %v1243, 64
      %v1339 = vpop.permute.xlu0 %1338
      %1340 = vrot.lane.b32.xlu0 %v1245, 64
      %v1341 = vpop.permute.xlu0 %1340
      %1342 = vrot.lane.b32.xlu0 %v1247, 64
      %v1343 = vpop.permute.xlu0 %1342
      %1344 = vrot.lane.b32.xlu0 %v1249, 64
      %v1345 = vpop.permute.xlu0 %1344
      %1346 = vrot.lane.b32.xlu0 %v1251, 64
      %v1347 = vpop.permute.xlu0 %1346
      %1348 = vrot.lane.b32.xlu0 %v1253, 64
      %v1349 = vpop.permute.xlu0 %1348
      %1350 = vrot.lane.b32.xlu0 %v1255, 64
      %v1351 = vpop.permute.xlu0 %1350
      %1352 = vrot.lane.b32.xlu0 %v1257, 64
      %v1353 = vpop.permute.xlu0 %1352
      %1354 = vrot.lane.b32.xlu0 %v1259, 64
      %v1355 = vpop.permute.xlu0 %1354
      %1356 = vrot.lane.b32.xlu0 %v1261, 64
      %v1357 = vpop.permute.xlu0 %1356
      %1358 = vrot.lane.b32.xlu0 %v1263, 64
      %v1359 = vpop.permute.xlu0 %1358
      %1360 = vrot.lane.b32.xlu0 %v1265, 64
      %v1361 = vpop.permute.xlu0 %1360
      %1362 = vrot.lane.b32.xlu0 %v1267, 64
      %v1363 = vpop.permute.xlu0 %1362
      %1364 = vrot.lane.b32.xlu0 %v1269, 64
      %v1365 = vpop.permute.xlu0 %1364
      %1366 = vrot.lane.b32.xlu0 %v1271, 64
      %v1367 = vpop.permute.xlu0 %1366
      %1368 = vrot.lane.b32.xlu0 %v1273, 64
      %v1369 = vpop.permute.xlu0 %1368
      %1370 = vrot.lane.b32.xlu0 %v1275, 64
      %v1371 = vpop.permute.xlu0 %1370
      %1372 = vrot.lane.b32.xlu0 %v1277, 64
      %v1373 = vpop.permute.xlu0 %1372
      %1374 = vrot.lane.b32.xlu0 %v1279, 64
      %v1375 = vpop.permute.xlu0 %1374
      %1376 = vrot.lane.b32.xlu0 %v1281, 64
      %v1377 = vpop.permute.xlu0 %1376
      %1378 = vrot.lane.b32.xlu0 %v1283, 64
      %v1379 = vpop.permute.xlu0 %1378
      %1380 = vrot.lane.b32.xlu0 %v1285, 64
      %v1381 = vpop.permute.xlu0 %1380
      %1382 = vrot.lane.b32.xlu0 %v1287, 64
      %v1383 = vpop.permute.xlu0 %1382
      %1384 = vrot.lane.b32.xlu0 %v1289, 64
      %v1385 = vpop.permute.xlu0 %1384
      %1386 = vrot.lane.b32.xlu0 %v1291, 64
      %v1387 = vpop.permute.xlu0 %1386
      %1388 = vrot.lane.b32.xlu0 %v1293, 64
      %v1389 = vpop.permute.xlu0 %1388
      %1390 = vrot.lane.b32.xlu0 %v1295, 64
      %v1391 = vpop.permute.xlu0 %1390
      %1392 = vrot.lane.b32.xlu0 %v1297, 64
      %v1393 = vpop.permute.xlu0 %1392
      %1394 = vrot.lane.b32.xlu0 %v1299, 64
      %v1395 = vpop.permute.xlu0 %1394
      %1396 = vrot.lane.b32.xlu0 %v1301, 64
      %v1397 = vpop.permute.xlu0 %1396
      %1398 = vrot.lane.b32.xlu0 %v1303, 64
      %v1399 = vpop.permute.xlu0 %1398
      %1400 = vrot.lane.b32.xlu0 %v1305, 64
      %v1401 = vpop.permute.xlu0 %1400
      %vm1450 = vcmask 1045504
      %v1451 = vrot.slane %v1032, 2
      %v1452 = vrot.slane %v1033, 2
      %v1453 = vsel %vm1450, %v1451, %v1452
      %v1454 = vrot.slane %v1034, 2
      %v1455 = vsel %vm1450, %v1452, %v1454
      %v1456 = vrot.slane %v1035, 2
      %v1457 = vsel %vm1450, %v1454, %v1456
      %v1458 = vrot.slane %v1036, 2
      %v1459 = vsel %vm1450, %v1456, %v1458
      %v1460 = vrot.slane %v1037, 2
      %v1461 = vsel %vm1450, %v1458, %v1460
      %v1462 = vrot.slane %v1038, 2
      %v1463 = vsel %vm1450, %v1460, %v1462
      %v1464 = vrot.slane %v1039, 2
      %v1465 = vsel %vm1450, %v1462, %v1464
      %v1466 = vrot.slane %v1040, 2
      %v1467 = vsel %vm1450, %v1464, %v1466
      %v1468 = vrot.slane %v1041, 2
      %v1469 = vsel %vm1450, %v1466, %v1468
      %v1470 = vrot.slane %v1042, 2
      %v1471 = vsel %vm1450, %v1468, %v1470
      %v1472 = vrot.slane %v1043, 2
      %v1473 = vsel %vm1450, %v1470, %v1472
      %v1474 = vrot.slane %v1044, 2
      %v1475 = vsel %vm1450, %v1472, %v1474
      %v1476 = vrot.slane %v1045, 2
      %v1477 = vsel %vm1450, %v1474, %v1476
      %v1478 = vrot.slane %v1046, 2
      %v1479 = vsel %vm1450, %v1476, %v1478
      %v1480 = vrot.slane %v1047, 2
      %v1481 = vsel %vm1450, %v1478, %v1480
      %v1482 = vrot.slane %v1048, 2
      %v1483 = vsel %vm1450, %v1480, %v1482
      %v1484 = vrot.slane %v1049, 2
      %v1485 = vsel %vm1450, %v1482, %v1484
      %v1486 = vrot.slane %v1050, 2
      %v1487 = vsel %vm1450, %v1484, %v1486
      %v1488 = vrot.slane %v1051, 2
      %v1489 = vsel %vm1450, %v1486, %v1488
      %v1490 = vrot.slane %v1052, 2
      %v1491 = vsel %vm1450, %v1488, %v1490
      %v1492 = vrot.slane %v1053, 2
      %v1493 = vsel %vm1450, %v1490, %v1492
      %v1494 = vrot.slane %v1054, 2
      %v1495 = vsel %vm1450, %v1492, %v1494
      %v1496 = vrot.slane %v1055, 2
      %v1497 = vsel %vm1450, %v1494, %v1496
      %v1498 = vrot.slane %v1056, 2
      %v1499 = vsel %vm1450, %v1496, %v1498
      %v1500 = vrot.slane %v1057, 2
      %v1501 = vsel %vm1450, %v1498, %v1500
      %v1502 = vrot.slane %v1058, 2
      %v1503 = vsel %vm1450, %v1500, %v1502
      %v1504 = vrot.slane %v1059, 2
      %v1505 = vsel %vm1450, %v1502, %v1504
      %v1506 = vrot.slane %v1060, 2
      %v1507 = vsel %vm1450, %v1504, %v1506
      %v1508 = vrot.slane %v1061, 2
      %v1509 = vsel %vm1450, %v1506, %v1508
      %v1510 = vrot.slane %v1062, 2
      %v1511 = vsel %vm1450, %v1508, %v1510
      %v1512 = vrot.slane %v1063, 2
      %v1513 = vsel %vm1450, %v1510, %v1512
      %v1514 = vrot.slane %v1064, 2
      %v1515 = vsel %vm1450, %v1512, %v1514
      %v1516 = vrot.slane %v1065, 2
      %v1517 = vsel %vm1450, %v1514, %v1516
      %v1518 = vrot.slane %v1066, 2
      %v1519 = vsel %vm1450, %v1516, %v1518
      %v1520 = vrot.slane %v1067, 2
      %v1521 = vsel %vm1450, %v1518, %v1520
      %v1522 = vrot.slane %v1068, 2
      %v1523 = vsel %vm1450, %v1520, %v1522
      %v1524 = vrot.slane %v1069, 2
      %v1525 = vsel %vm1450, %v1522, %v1524
      %v1526 = vrot.slane %v1070, 2
      %v1527 = vsel %vm1450, %v1524, %v1526
      %v1528 = vrot.slane %v1071, 2
      %v1529 = vsel %vm1450, %v1526, %v1528
      %v1530 = vrot.slane %v1072, 2
      %v1531 = vsel %vm1450, %v1528, %v1530
      %v1532 = vrot.slane %v1073, 2
      %v1533 = vsel %vm1450, %v1530, %v1532
      %v1534 = vrot.slane %v1074, 2
      %v1535 = vsel %vm1450, %v1532, %v1534
      %v1536 = vrot.slane %v1075, 2
      %v1537 = vsel %vm1450, %v1534, %v1536
      %v1538 = vrot.slane %v1076, 2
      %v1539 = vsel %vm1450, %v1536, %v1538
      %v1540 = vrot.slane %v1077, 2
      %v1541 = vsel %vm1450, %v1538, %v1540
      %v1542 = vrot.slane %v1078, 2
      %v1543 = vsel %vm1450, %v1540, %v1542
      %v1544 = vrot.slane %v1079, 2
      %v1545 = vsel %vm1450, %v1542, %v1544
      %v1546 = vrot.slane %v1080, 2
      %v1547 = vsel %vm1450, %v1544, %v1546
      %v1596 = vsel %vm487, %v1032, %v1307
      %v1597 = vsel %vm487, %v1033, %v1309
      %v1598 = vsel %vm487, %v1034, %v1311
      %v1599 = vsel %vm487, %v1035, %v1313
      %v1600 = vsel %vm487, %v1036, %v1315
      %v1601 = vsel %vm487, %v1037, %v1317
      %v1602 = vsel %vm487, %v1038, %v1319
      %v1603 = vsel %vm487, %v1039, %v1321
      %v1604 = vsel %vm487, %v1040, %v1323
      %v1605 = vsel %vm487, %v1041, %v1325
      %v1606 = vsel %vm487, %v1042, %v1327
      %v1607 = vsel %vm487, %v1043, %v1329
      %v1608 = vsel %vm487, %v1044, %v1331
      %v1609 = vsel %vm487, %v1045, %v1333
      %v1610 = vsel %vm487, %v1046, %v1335
      %v1611 = vsel %vm487, %v1047, %v1337
      %v1612 = vsel %vm487, %v1048, %v1339
      %v1613 = vsel %vm487, %v1049, %v1341
      %v1614 = vsel %vm487, %v1050, %v1343
      %v1615 = vsel %vm487, %v1051, %v1345
      %v1616 = vsel %vm487, %v1052, %v1347
      %v1617 = vsel %vm487, %v1053, %v1349
      %v1618 = vsel %vm487, %v1054, %v1351
      %v1619 = vsel %vm487, %v1055, %v1353
      %v1620 = vsel %vm487, %v1056, %v1355
      %v1621 = vsel %vm487, %v1057, %v1357
      %v1622 = vsel %vm487, %v1058, %v1359
      %v1623 = vsel %vm487, %v1059, %v1361
      %v1624 = vsel %vm487, %v1060, %v1363
      %v1625 = vsel %vm487, %v1061, %v1365
      %v1626 = vsel %vm487, %v1062, %v1367
      %v1627 = vsel %vm487, %v1063, %v1369
      %v1628 = vsel %vm487, %v1064, %v1371
      %v1629 = vsel %vm487, %v1065, %v1373
      %v1630 = vsel %vm487, %v1066, %v1375
      %v1631 = vsel %vm487, %v1067, %v1377
      %v1632 = vsel %vm487, %v1068, %v1379
      %v1633 = vsel %vm487, %v1069, %v1381
      %v1634 = vsel %vm487, %v1070, %v1383
      %v1635 = vsel %vm487, %v1071, %v1385
      %v1636 = vsel %vm487, %v1072, %v1387
      %v1637 = vsel %vm487, %v1073, %v1389
      %v1638 = vsel %vm487, %v1074, %v1391
      %v1639 = vsel %vm487, %v1075, %v1393
      %v1640 = vsel %vm487, %v1076, %v1395
      %v1641 = vsel %vm487, %v1077, %v1397
      %v1642 = vsel %vm487, %v1078, %v1399
      %v1643 = vsel %vm487, %v1079, %v1401
      %v1644 = vpack.c.bf16 %v1597, %v1596
      %v1645 = vpack.c.bf16 %v1455, %v1453
      %v1646 = vpack.c.bf16 %v1599, %v1598
      %v1647 = vpack.c.bf16 %v1459, %v1457
      %v1648 = vpack.c.bf16 %v1601, %v1600
      %v1649 = vpack.c.bf16 %v1463, %v1461
      %v1650 = vpack.c.bf16 %v1603, %v1602
      %v1651 = vpack.c.bf16 %v1467, %v1465
      %v1652 = vpack.c.bf16 %v1605, %v1604
      %v1653 = vpack.c.bf16 %v1471, %v1469
      %v1654 = vpack.c.bf16 %v1607, %v1606
      %v1655 = vpack.c.bf16 %v1475, %v1473
      %v1656 = vpack.c.bf16 %v1609, %v1608
      %v1657 = vpack.c.bf16 %v1479, %v1477
      %v1658 = vpack.c.bf16 %v1611, %v1610
      %v1659 = vpack.c.bf16 %v1483, %v1481
      %v1660 = vpack.c.bf16 %v1613, %v1612
      %v1661 = vpack.c.bf16 %v1487, %v1485
      %v1662 = vpack.c.bf16 %v1615, %v1614
      %v1663 = vpack.c.bf16 %v1491, %v1489
      %v1664 = vpack.c.bf16 %v1617, %v1616
      %v1665 = vpack.c.bf16 %v1495, %v1493
      %v1666 = vpack.c.bf16 %v1619, %v1618
      %v1667 = vpack.c.bf16 %v1499, %v1497
      %v1668 = vpack.c.bf16 %v1621, %v1620
      %v1669 = vpack.c.bf16 %v1503, %v1501
      %v1670 = vpack.c.bf16 %v1623, %v1622
      %v1671 = vpack.c.bf16 %v1507, %v1505
      %v1672 = vpack.c.bf16 %v1625, %v1624
      %v1673 = vpack.c.bf16 %v1511, %v1509
      %v1674 = vpack.c.bf16 %v1627, %v1626
      %v1675 = vpack.c.bf16 %v1515, %v1513
      %v1676 = vpack.c.bf16 %v1629, %v1628
      %v1677 = vpack.c.bf16 %v1519, %v1517
      %v1678 = vpack.c.bf16 %v1631, %v1630
      %v1679 = vpack.c.bf16 %v1523, %v1521
      %v1680 = vpack.c.bf16 %v1633, %v1632
      %v1681 = vpack.c.bf16 %v1527, %v1525
      %v1682 = vpack.c.bf16 %v1635, %v1634
      %v1683 = vpack.c.bf16 %v1531, %v1529
      %v1684 = vpack.c.bf16 %v1637, %v1636
      %v1685 = vpack.c.bf16 %v1535, %v1533
      %v1686 = vpack.c.bf16 %v1639, %v1638
      %v1687 = vpack.c.bf16 %v1539, %v1537
      %v1688 = vpack.c.bf16 %v1641, %v1640
      %v1689 = vpack.c.bf16 %v1543, %v1541
      %v1690 = vpack.c.bf16 %v1643, %v1642
      %v1691 = vpack.c.bf16 %v1547, %v1545
      %v1695 = vrot.slane %v1081, 1
      %v1696 = vsel %vm1208, %v1304, %v1695
      %v1697 = vrot.slane %v1082, 1
      %v1698 = vsel %vm1208, %v1695, %v1697
      %v1699 = vrot.slane %v1083, 1
      %v1700 = vsel %vm1208, %v1697, %v1699
      %1701 = vrot.lane.b32.xlu0 %v1696, 64
      %v1702 = vpop.permute.xlu0 %1701
      %1703 = vrot.lane.b32.xlu0 %v1698, 64
      %v1704 = vpop.permute.xlu0 %1703
      %1705 = vrot.lane.b32.xlu0 %v1700, 64
      %v1706 = vpop.permute.xlu0 %1705
      %v1710 = vrot.slane %v1081, 2
      %v1711 = vsel %vm1450, %v1546, %v1710
      %v1712 = vrot.slane %v1082, 2
      %v1713 = vsel %vm1450, %v1710, %v1712
      %v1714 = vrot.slane %v1083, 2
      %v1715 = vsel %vm1450, %v1712, %v1714
      %v1719 = vsel %vm487, %v1080, %v1702
      %v1720 = vsel %vm487, %v1081, %v1704
      %v1721 = vsel %vm487, %v1082, %v1706
      %v1722 = vpack.c.bf16 %v1600, %v1599
      %v1723 = vpack.c.bf16 %v1461, %v1459
      %v1724 = vpack.c.bf16 %v1602, %v1601
      %v1725 = vpack.c.bf16 %v1465, %v1463
      %v1726 = vpack.c.bf16 %v1604, %v1603
      %v1727 = vpack.c.bf16 %v1469, %v1467
      %v1728 = vpack.c.bf16 %v1606, %v1605
      %v1729 = vpack.c.bf16 %v1473, %v1471
      %v1730 = vpack.c.bf16 %v1608, %v1607
      %v1731 = vpack.c.bf16 %v1477, %v1475
      %v1732 = vpack.c.bf16 %v1610, %v1609
      %v1733 = vpack.c.bf16 %v1481, %v1479
      %v1734 = vpack.c.bf16 %v1612, %v1611
      %v1735 = vpack.c.bf16 %v1485, %v1483
      %v1736 = vpack.c.bf16 %v1614, %v1613
      %v1737 = vpack.c.bf16 %v1489, %v1487
      %v1738 = vpack.c.bf16 %v1616, %v1615
      %v1739 = vpack.c.bf16 %v1493, %v1491
      %v1740 = vpack.c.bf16 %v1618, %v1617
      %v1741 = vpack.c.bf16 %v1497, %v1495
      %v1742 = vpack.c.bf16 %v1620, %v1619
      %v1743 = vpack.c.bf16 %v1501, %v1499
      %v1744 = vpack.c.bf16 %v1622, %v1621
      %v1745 = vpack.c.bf16 %v1505, %v1503
      %v1746 = vpack.c.bf16 %v1624, %v1623
      %v1747 = vpack.c.bf16 %v1509, %v1507
      %v1748 = vpack.c.bf16 %v1626, %v1625
      %v1749 = vpack.c.bf16 %v1513, %v1511
      %v1750 = vpack.c.bf16 %v1628, %v1627
      %v1751 = vpack.c.bf16 %v1517, %v1515
      %v1752 = vpack.c.bf16 %v1630, %v1629
      %v1753 = vpack.c.bf16 %v1521, %v1519
      %v1754 = vpack.c.bf16 %v1632, %v1631
      %v1755 = vpack.c.bf16 %v1525, %v1523
      %v1756 = vpack.c.bf16 %v1634, %v1633
      %v1757 = vpack.c.bf16 %v1529, %v1527
      %v1758 = vpack.c.bf16 %v1636, %v1635
      %v1759 = vpack.c.bf16 %v1533, %v1531
      %v1760 = vpack.c.bf16 %v1638, %v1637
      %v1761 = vpack.c.bf16 %v1537, %v1535
      %v1762 = vpack.c.bf16 %v1640, %v1639
      %v1763 = vpack.c.bf16 %v1541, %v1539
      %v1764 = vpack.c.bf16 %v1642, %v1641
      %v1765 = vpack.c.bf16 %v1545, %v1543
      %v1766 = vpack.c.bf16 %v1719, %v1643
      %v1767 = vpack.c.bf16 %v1711, %v1547
      %v1768 = vpack.c.bf16 %v1721, %v1720
      %v1769 = vpack.c.bf16 %v1715, %v1713
      %v1794 = vunpack.c.l.b16 %v1111
      %v1795 = vunpack.c.l.b16 %v1112
      %v1796 = vunpack.c.l.b16 %v1113
      %v1797 = vunpack.c.l.b16 %v1114
      %v1798 = vunpack.c.l.b16 %v1115
      %v1799 = vunpack.c.l.b16 %v1116
      %v1800 = vunpack.c.l.b16 %v1117
      %v1801 = vunpack.c.l.b16 %v1118
      %v1802 = vunpack.c.l.b16 %v1119
      %v1803 = vunpack.c.l.b16 %v1120
      %v1804 = vunpack.c.l.b16 %v1121
      %v1805 = vunpack.c.l.b16 %v1122
      %v1806 = vunpack.c.l.b16 %v1123
      %v1807 = vunpack.c.l.b16 %v1124
      %v1808 = vunpack.c.l.b16 %v1125
      %v1809 = vunpack.c.l.b16 %v1126
      %v1810 = vunpack.c.l.b16 %v1127
      %v1811 = vunpack.c.l.b16 %v1128
      %v1812 = vunpack.c.l.b16 %v1129
      %v1813 = vunpack.c.l.b16 %v1130
      %v1814 = vunpack.c.l.b16 %v1131
      %v1815 = vunpack.c.l.b16 %v1132
      %v1816 = vunpack.c.l.b16 %v1133
      %v1817 = vunpack.c.l.b16 %v1134
      %v1818 = vpack.c.b16 %v1795, %v1794
      %v1819 = vpack.c.b16 %v1797, %v1796
      %v1820 = vpack.c.b16 %v1799, %v1798
      %v1821 = vpack.c.b16 %v1801, %v1800
      %v1822 = vpack.c.b16 %v1803, %v1802
      %v1823 = vpack.c.b16 %v1805, %v1804
      %v1824 = vpack.c.b16 %v1807, %v1806
      %v1825 = vpack.c.b16 %v1809, %v1808
      %v1826 = vpack.c.b16 %v1811, %v1810
      %v1827 = vpack.c.b16 %v1813, %v1812
      %v1828 = vpack.c.b16 %v1815, %v1814
      %v1829 = vpack.c.b16 %v1817, %v1816
      %v1843 = vsel %vm487, %v1723, 0
      %v1846 = vsel %vm487, %v1725, 0
      %v1849 = vsel %vm487, %v1727, 0
      %v1852 = vsel %vm487, %v1729, 0
      %v1855 = vsel %vm487, %v1731, 0
      %v1858 = vsel %vm487, %v1733, 0
      %v1861 = vsel %vm487, %v1735, 0
      %v1864 = vsel %vm487, %v1737, 0
      %v1867 = vsel %vm487, %v1739, 0
      %v1870 = vsel %vm487, %v1741, 0
      %v1873 = vsel %vm487, %v1743, 0
      %v1876 = vsel %vm487, %v1745, 0
      %v1879 = vsel %vm487, %v1747, 0
      %v1882 = vsel %vm487, %v1749, 0
      %v1885 = vsel %vm487, %v1751, 0
      %v1888 = vsel %vm487, %v1753, 0
      %v1891 = vsel %vm487, %v1755, 0
      %v1894 = vsel %vm487, %v1757, 0
      %v1897 = vsel %vm487, %v1759, 0
      %v1900 = vsel %vm487, %v1761, 0
      %v1903 = vsel %vm487, %v1763, 0
      %v1906 = vsel %vm487, %v1765, 0
      %v1909 = vsel %vm487, %v1767, 0
      %v1912 = vsel %vm487, %v1769, 0
      %1914 = vmatprep.subr.bf16.mxu0 0
      %1915 = vmatpush1.bf16.msra.mxu0 %v1818
      %1916 = vmatprep.subr.bf16.mxu0 0
      %1917 = vmatpush1.bf16.msra.mxu0 %v1819
      %1918 = vmatprep.subr.bf16.mxu0 0
      %1919 = vmatpush1.bf16.msra.mxu0 %v1820
      %1920 = vmatprep.subr.bf16.mxu0 0
      %1921 = vmatpush1.bf16.msra.mxu0 %v1821
      %1922 = vmatprep.subr.bf16.mxu0 0
      %1923 = vmatpush1.bf16.msra.mxu0 %v1822
      %1924 = vmatprep.subr.bf16.mxu0 0
      %1925 = vmatpush1.bf16.msra.mxu0 %v1823
      %1926 = vmatprep.subr.bf16.mxu0 0
      %1927 = vmatpush1.bf16.msra.mxu0 %v1824
      %1928 = vmatprep.subr.bf16.mxu0 0
      %1929 = vmatpush1.bf16.msra.mxu0 %v1825
      %1930 = vmatprep.subr.bf16.mxu0 0
      %1931 = vmatpush1.bf16.msra.mxu0 %v1826
      %1932 = vmatprep.subr.bf16.mxu0 0
      %1933 = vmatpush1.bf16.msra.mxu0 %v1827
      %1934 = vmatprep.subr.bf16.mxu0 0
      %1935 = vmatpush1.bf16.msra.mxu0 %v1828
      %1936 = vmatprep.subr.bf16.mxu0 0
      %1937 = vmatpush1.bf16.msra.mxu0 %v1829
      %1938 = vmatprep.subr.bf16.mxu0 0
      %1939 = vmatpush1.bf16.msra.mxu0 0
      %1940 = vmatprep.subr.bf16.mxu0 0
      %1941 = vmatpush1.bf16.msra.mxu0 0
      %1942 = vmatprep.subr.bf16.mxu0 0
      %1943 = vmatpush1.bf16.msra.mxu0 0
      %1944 = vmatprep.subr.bf16.mxu0 0
      %1945 = vmatpush1.bf16.msra.mxu0 0
      %1946 = vmatprep.mubr.bf16.mxu0 %v1843
      %1947 = vmatmul.mubr.bf16.gmra.mrb[0].mxu0 %v1722
      %v1948 = vpop.f32.mrb[0].mxu0
      %v1949 = vadd.f32 0.0, %v1948
      %v1950 = vpop.f32.mrb[0].mxu0
      %v1951 = vpop.f32.mrb[0].mxu0
      %v1952 = vadd.f32 0.0, %v1951
      %v1953 = vpop.f32.mrb[0].mxu0
      %1954 = vmatprep.mubr.bf16.mxu0 %v1846
      %1955 = vmatmul.mubr.bf16.gmra.mrb[0].mxu0 %v1724
      %v1956 = vpop.f32.mrb[0].mxu0
      %v1957 = vadd.f32 0.0, %v1956
      %v1958 = vpop.f32.mrb[0].mxu0
      %v1959 = vpop.f32.mrb[0].mxu0
      %v1960 = vadd.f32 0.0, %v1959
      %v1961 = vpop.f32.mrb[0].mxu0
      %1962 = vmatprep.mubr.bf16.mxu0 %v1849
      %1963 = vmatmul.mubr.bf16.gmra.mrb[0].mxu0 %v1726
      %v1964 = vpop.f32.mrb[0].mxu0
      %v1965 = vadd.f32 0.0, %v1964
      %v1966 = vpop.f32.mrb[0].mxu0
      %v1967 = vpop.f32.mrb[0].mxu0
      %v1968 = vadd.f32 0.0, %v1967
      %v1969 = vpop.f32.mrb[0].mxu0
      %1970 = vmatprep.mubr.bf16.mxu0 %v1852
      %1971 = vmatmul.mubr.bf16.gmra.mrb[0].mxu0 %v1728
      %v1972 = vpop.f32.mrb[0].mxu0
      %v1973 = vadd.f32 0.0, %v1972
      %v1974 = vpop.f32.mrb[0].mxu0
      %v1975 = vpop.f32.mrb[0].mxu0
      %v1976 = vadd.f32 0.0, %v1975
      %v1977 = vpop.f32.mrb[0].mxu0
      %1978 = vmatprep.mubr.bf16.mxu0 %v1855
      %1979 = vmatmul.mubr.bf16.gmra.mrb[0].mxu0 %v1730
      %v1980 = vpop.f32.mrb[0].mxu0
      %v1981 = vadd.f32 0.0, %v1980
      %v1982 = vpop.f32.mrb[0].mxu0
      %v1983 = vpop.f32.mrb[0].mxu0
      %v1984 = vadd.f32 0.0, %v1983
      %v1985 = vpop.f32.mrb[0].mxu0
      %1986 = vmatprep.mubr.bf16.mxu0 %v1858
      %1987 = vmatmul.mubr.bf16.gmra.mrb[0].mxu0 %v1732
      %v1988 = vpop.f32.mrb[0].mxu0
      %v1989 = vadd.f32 0.0, %v1988
      %v1990 = vpop.f32.mrb[0].mxu0
      %v1991 = vpop.f32.mrb[0].mxu0
      %v1992 = vadd.f32 0.0, %v1991
      %v1993 = vpop.f32.mrb[0].mxu0
      %1994 = vmatprep.mubr.bf16.mxu0 %v1861
      %1995 = vmatmul.mubr.bf16.gmra.mrb[0].mxu0 %v1734
      %v1996 = vpop.f32.mrb[0].mxu0
      %v1997 = vadd.f32 0.0, %v1996
      %v1998 = vpop.f32.mrb[0].mxu0
      %v1999 = vpop.f32.mrb[0].mxu0
      %v2000 = vadd.f32 0.0, %v1999
      %v2001 = vpop.f32.mrb[0].mxu0
      %2002 = vmatprep.mubr.bf16.mxu0 %v1864
      %2003 = vmatmul.mubr.bf16.gmra.mrb[0].mxu0 %v1736
      %v2004 = vpop.f32.mrb[0].mxu0
      %v2005 = vadd.f32 0.0, %v2004
      %v2006 = vpop.f32.mrb[0].mxu0
      %v2007 = vpop.f32.mrb[0].mxu0
      %v2008 = vadd.f32 0.0, %v2007
      %v2009 = vpop.f32.mrb[0].mxu0
      %2010 = vmatprep.mubr.bf16.mxu0 %v1867
      %2011 = vmatmul.mubr.bf16.gmra.mrb[0].mxu0 %v1738
      %v2012 = vpop.f32.mrb[0].mxu0
      %v2013 = vadd.f32 0.0, %v2012
      %v2014 = vpop.f32.mrb[0].mxu0
      %v2015 = vpop.f32.mrb[0].mxu0
      %v2016 = vadd.f32 0.0, %v2015
      %v2017 = vpop.f32.mrb[0].mxu0
      %2018 = vmatprep.mubr.bf16.mxu0 %v1870
      %2019 = vmatmul.mubr.bf16.gmra.mrb[0].mxu0 %v1740
      %v2020 = vpop.f32.mrb[0].mxu0
      %v2021 = vadd.f32 0.0, %v2020
      %v2022 = vpop.f32.mrb[0].mxu0
      %v2023 = vpop.f32.mrb[0].mxu0
      %v2024 = vadd.f32 0.0, %v2023
      %v2025 = vpop.f32.mrb[0].mxu0
      %2026 = vmatprep.mubr.bf16.mxu0 %v1873
      %2027 = vmatmul.mubr.bf16.gmra.mrb[0].mxu0 %v1742
      %v2028 = vpop.f32.mrb[0].mxu0
      %v2029 = vadd.f32 0.0, %v2028
      %v2030 = vpop.f32.mrb[0].mxu0
      %v2031 = vpop.f32.mrb[0].mxu0
      %v2032 = vadd.f32 0.0, %v2031
      %v2033 = vpop.f32.mrb[0].mxu0
      %2034 = vmatprep.mubr.bf16.mxu0 %v1876
      %2035 = vmatmul.mubr.bf16.gmra.mrb[0].mxu0 %v1744
      %v2036 = vpop.f32.mrb[0].mxu0
      %v2037 = vadd.f32 0.0, %v2036
      %v2038 = vpop.f32.mrb[0].mxu0
      %v2039 = vpop.f32.mrb[0].mxu0
      %v2040 = vadd.f32 0.0, %v2039
      %v2041 = vpop.f32.mrb[0].mxu0
      %2042 = vmatprep.mubr.bf16.mxu0 %v1879
      %2043 = vmatmul.mubr.bf16.gmra.mrb[0].mxu0 %v1746
      %v2044 = vpop.f32.mrb[0].mxu0
      %v2045 = vadd.f32 0.0, %v2044
      %v2046 = vpop.f32.mrb[0].mxu0
      %v2047 = vpop.f32.mrb[0].mxu0
      %v2048 = vadd.f32 0.0, %v2047
      %v2049 = vpop.f32.mrb[0].mxu0
      %2050 = vmatprep.mubr.bf16.mxu0 %v1882
      %2051 = vmatmul.mubr.bf16.gmra.mrb[0].mxu0 %v1748
      %v2052 = vpop.f32.mrb[0].mxu0
      %v2053 = vadd.f32 0.0, %v2052
      %v2054 = vpop.f32.mrb[0].mxu0
      %v2055 = vpop.f32.mrb[0].mxu0
      %v2056 = vadd.f32 0.0, %v2055
      %v2057 = vpop.f32.mrb[0].mxu0
      %2058 = vmatprep.mubr.bf16.mxu0 %v1885
      %2059 = vmatmul.mubr.bf16.gmra.mrb[0].mxu0 %v1750
      %v2060 = vpop.f32.mrb[0].mxu0
      %v2061 = vadd.f32 0.0, %v2060
      %v2062 = vpop.f32.mrb[0].mxu0
      %v2063 = vpop.f32.mrb[0].mxu0
      %v2064 = vadd.f32 0.0, %v2063
      %v2065 = vpop.f32.mrb[0].mxu0
      %2066 = vmatprep.mubr.bf16.mxu0 %v1888
      %2067 = vmatmul.mubr.bf16.gmra.mrb[0].mxu0 %v1752
      %v2068 = vpop.f32.mrb[0].mxu0
      %v2069 = vadd.f32 0.0, %v2068
      %v2070 = vpop.f32.mrb[0].mxu0
      %v2071 = vpop.f32.mrb[0].mxu0
      %v2072 = vadd.f32 0.0, %v2071
      %v2073 = vpop.f32.mrb[0].mxu0
      %2074 = vmatprep.mubr.bf16.mxu0 %v1891
      %2075 = vmatmul.mubr.bf16.gmra.mrb[0].mxu0 %v1754
      %v2076 = vpop.f32.mrb[0].mxu0
      %v2077 = vadd.f32 0.0, %v2076
      %v2078 = vpop.f32.mrb[0].mxu0
      %v2079 = vpop.f32.mrb[0].mxu0
      %v2080 = vadd.f32 0.0, %v2079
      %v2081 = vpop.f32.mrb[0].mxu0
      %2082 = vmatprep.mubr.bf16.mxu0 %v1894
      %2083 = vmatmul.mubr.bf16.gmra.mrb[0].mxu0 %v1756
      %v2084 = vpop.f32.mrb[0].mxu0
      %v2085 = vadd.f32 0.0, %v2084
      %v2086 = vpop.f32.mrb[0].mxu0
      %v2087 = vpop.f32.mrb[0].mxu0
      %v2088 = vadd.f32 0.0, %v2087
      %v2089 = vpop.f32.mrb[0].mxu0
      %2090 = vmatprep.mubr.bf16.mxu0 %v1897
      %2091 = vmatmul.mubr.bf16.gmra.mrb[0].mxu0 %v1758
      %v2092 = vpop.f32.mrb[0].mxu0
      %v2093 = vadd.f32 0.0, %v2092
      %v2094 = vpop.f32.mrb[0].mxu0
      %v2095 = vpop.f32.mrb[0].mxu0
      %v2096 = vadd.f32 0.0, %v2095
      %v2097 = vpop.f32.mrb[0].mxu0
      %2098 = vmatprep.mubr.bf16.mxu0 %v1900
      %2099 = vmatmul.mubr.bf16.gmra.mrb[0].mxu0 %v1760
      %v2100 = vpop.f32.mrb[0].mxu0
      %v2101 = vadd.f32 0.0, %v2100
      %v2102 = vpop.f32.mrb[0].mxu0
      %v2103 = vpop.f32.mrb[0].mxu0
      %v2104 = vadd.f32 0.0, %v2103
      %v2105 = vpop.f32.mrb[0].mxu0
      %2106 = vmatprep.mubr.bf16.mxu0 %v1903
      %2107 = vmatmul.mubr.bf16.gmra.mrb[0].mxu0 %v1762
      %v2108 = vpop.f32.mrb[0].mxu0
      %v2109 = vadd.f32 0.0, %v2108
      %v2110 = vpop.f32.mrb[0].mxu0
      %v2111 = vpop.f32.mrb[0].mxu0
      %v2112 = vadd.f32 0.0, %v2111
      %v2113 = vpop.f32.mrb[0].mxu0
      %2114 = vmatprep.mubr.bf16.mxu0 %v1906
      %2115 = vmatmul.mubr.bf16.gmra.mrb[0].mxu0 %v1764
      %v2116 = vpop.f32.mrb[0].mxu0
      %v2117 = vadd.f32 0.0, %v2116
      %v2118 = vpop.f32.mrb[0].mxu0
      %v2119 = vpop.f32.mrb[0].mxu0
      %v2120 = vadd.f32 0.0, %v2119
      %v2121 = vpop.f32.mrb[0].mxu0
      %2122 = vmatprep.mubr.bf16.mxu0 %v1909
      %2123 = vmatmul.mubr.bf16.gmra.mrb[0].mxu0 %v1766
      %v2124 = vpop.f32.mrb[0].mxu0
      %v2125 = vadd.f32 0.0, %v2124
      %v2126 = vpop.f32.mrb[0].mxu0
      %v2127 = vpop.f32.mrb[0].mxu0
      %v2128 = vadd.f32 0.0, %v2127
      %v2129 = vpop.f32.mrb[0].mxu0
      %2130 = vmatprep.mubr.bf16.mxu0 %v1912
      %2131 = vmatmul.mubr.bf16.gmra.mrb[0].mxu0 %v1768
      %v2132 = vpop.f32.mrb[0].mxu0
      %v2133 = vadd.f32 0.0, %v2132
      %v2134 = vpop.f32.mrb[0].mxu0
      %v2135 = vpop.f32.mrb[0].mxu0
      %v2136 = vadd.f32 0.0, %v2135
      %v2137 = vpop.f32.mrb[0].mxu0
      %2138 = vdwg.mxu0
      %v2163 = vunpack.c.l.b16 %v1087
      %v2164 = vunpack.c.l.b16 %v1088
      %v2165 = vunpack.c.l.b16 %v1089
      %v2166 = vunpack.c.l.b16 %v1090
      %v2167 = vunpack.c.l.b16 %v1091
      %v2168 = vunpack.c.l.b16 %v1092
      %v2169 = vunpack.c.l.b16 %v1093
      %v2170 = vunpack.c.l.b16 %v1094
      %v2171 = vunpack.c.l.b16 %v1095
      %v2172 = vunpack.c.l.b16 %v1096
      %v2173 = vunpack.c.l.b16 %v1097
      %v2174 = vunpack.c.l.b16 %v1098
      %v2175 = vunpack.c.l.b16 %v1099
      %v2176 = vunpack.c.l.b16 %v1100
      %v2177 = vunpack.c.l.b16 %v1101
      %v2178 = vunpack.c.l.b16 %v1102
      %v2179 = vunpack.c.l.b16 %v1103
      %v2180 = vunpack.c.l.b16 %v1104
      %v2181 = vunpack.c.l.b16 %v1105
      %v2182 = vunpack.c.l.b16 %v1106
      %v2183 = vunpack.c.l.b16 %v1107
      %v2184 = vunpack.c.l.b16 %v1108
      %v2185 = vunpack.c.l.b16 %v1109
      %v2186 = vunpack.c.l.b16 %v1110
      %v2187 = vpack.c.b16 %v2164, %v2163
      %v2188 = vpack.c.b16 %v2166, %v2165
      %v2189 = vpack.c.b16 %v2168, %v2167
      %v2190 = vpack.c.b16 %v2170, %v2169
      %v2191 = vpack.c.b16 %v2172, %v2171
      %v2192 = vpack.c.b16 %v2174, %v2173
      %v2193 = vpack.c.b16 %v2176, %v2175
      %v2194 = vpack.c.b16 %v2178, %v2177
      %v2195 = vpack.c.b16 %v2180, %v2179
      %v2196 = vpack.c.b16 %v2182, %v2181
      %v2197 = vpack.c.b16 %v2184, %v2183
      %v2198 = vpack.c.b16 %v2186, %v2185
      %v2212 = vsel %vm487, %v1645, 0
      %v2215 = vsel %vm487, %v1647, 0
      %v2218 = vsel %vm487, %v1649, 0
      %v2221 = vsel %vm487, %v1651, 0
      %v2224 = vsel %vm487, %v1653, 0
      %v2227 = vsel %vm487, %v1655, 0
      %v2230 = vsel %vm487, %v1657, 0
      %v2233 = vsel %vm487, %v1659, 0
      %v2236 = vsel %vm487, %v1661, 0
      %v2239 = vsel %vm487, %v1663, 0
      %v2242 = vsel %vm487, %v1665, 0
      %v2245 = vsel %vm487, %v1667, 0
      %v2248 = vsel %vm487, %v1669, 0
      %v2251 = vsel %vm487, %v1671, 0
      %v2254 = vsel %vm487, %v1673, 0
      %v2257 = vsel %vm487, %v1675, 0
      %v2260 = vsel %vm487, %v1677, 0
      %v2263 = vsel %vm487, %v1679, 0
      %v2266 = vsel %vm487, %v1681, 0
      %v2269 = vsel %vm487, %v1683, 0
      %v2272 = vsel %vm487, %v1685, 0
      %v2275 = vsel %vm487, %v1687, 0
      %v2278 = vsel %vm487, %v1689, 0
      %v2281 = vsel %vm487, %v1691, 0
      %2283 = vmatprep.subr.bf16.mxu0 0
      %2284 = vmatpush1.bf16.msra.mxu0 %v2187
      %2285 = vmatprep.subr.bf16.mxu0 0
      %2286 = vmatpush1.bf16.msra.mxu0 %v2188
      %2287 = vmatprep.subr.bf16.mxu0 0
      %2288 = vmatpush1.bf16.msra.mxu0 %v2189
      %2289 = vmatprep.subr.bf16.mxu0 0
      %2290 = vmatpush1.bf16.msra.mxu0 %v2190
      %2291 = vmatprep.subr.bf16.mxu0 0
      %2292 = vmatpush1.bf16.msra.mxu0 %v2191
      %2293 = vmatprep.subr.bf16.mxu0 0
      %2294 = vmatpush1.bf16.msra.mxu0 %v2192
      %2295 = vmatprep.subr.bf16.mxu0 0
      %2296 = vmatpush1.bf16.msra.mxu0 %v2193
      %2297 = vmatprep.subr.bf16.mxu0 0
      %2298 = vmatpush1.bf16.msra.mxu0 %v2194
      %2299 = vmatprep.subr.bf16.mxu0 0
      %2300 = vmatpush1.bf16.msra.mxu0 %v2195
      %2301 = vmatprep.subr.bf16.mxu0 0
      %2302 = vmatpush1.bf16.msra.mxu0 %v2196
      %2303 = vmatprep.subr.bf16.mxu0 0
      %2304 = vmatpush1.bf16.msra.mxu0 %v2197
      %2305 = vmatprep.subr.bf16.mxu0 0
      %2306 = vmatpush1.bf16.msra.mxu0 %v2198
      %2307 = vmatprep.subr.bf16.mxu0 0
      %2308 = vmatpush1.bf16.msra.mxu0 0
      %2309 = vmatprep.subr.bf16.mxu0 0
      %2310 = vmatpush1.bf16.msra.mxu0 0
      %2311 = vmatprep.subr.bf16.mxu0 0
      %2312 = vmatpush1.bf16.msra.mxu0 0
      %2313 = vmatprep.subr.bf16.mxu0 0
      %2314 = vmatpush1.bf16.msra.mxu0 0
      %2315 = vmatprep.mubr.bf16.mxu0 %v2212
      %2316 = vmatmul.mubr.bf16.gmra.mrb[0].mxu0 %v1644
      %v2317 = vpop.f32.mrb[0].mxu0
      %v2318 = vadd.f32 %v1949, %v2317
      %v2319 = vpop.f32.mrb[0].mxu0
      %v2320 = vpop.f32.mrb[0].mxu0
      %v2321 = vadd.f32 %v1952, %v2320
      %v2322 = vpop.f32.mrb[0].mxu0
      %2323 = vmatprep.mubr.bf16.mxu0 %v2215
      %2324 = vmatmul.mubr.bf16.gmra.mrb[0].mxu0 %v1646
      %v2325 = vpop.f32.mrb[0].mxu0
      %v2326 = vadd.f32 %v1957, %v2325
      %v2327 = vpop.f32.mrb[0].mxu0
      %v2328 = vpop.f32.mrb[0].mxu0
      %v2329 = vadd.f32 %v1960, %v2328
      %v2330 = vpop.f32.mrb[0].mxu0
      %2331 = vmatprep.mubr.bf16.mxu0 %v2218
      %2332 = vmatmul.mubr.bf16.gmra.mrb[0].mxu0 %v1648
      %v2333 = vpop.f32.mrb[0].mxu0
      %v2334 = vadd.f32 %v1965, %v2333
      %v2335 = vpop.f32.mrb[0].mxu0
      %v2336 = vpop.f32.mrb[0].mxu0
      %v2337 = vadd.f32 %v1968, %v2336
      %v2338 = vpop.f32.mrb[0].mxu0
      %2339 = vmatprep.mubr.bf16.mxu0 %v2221
      %2340 = vmatmul.mubr.bf16.gmra.mrb[0].mxu0 %v1650
      %v2341 = vpop.f32.mrb[0].mxu0
      %v2342 = vadd.f32 %v1973, %v2341
      %v2343 = vpop.f32.mrb[0].mxu0
      %v2344 = vpop.f32.mrb[0].mxu0
      %v2345 = vadd.f32 %v1976, %v2344
      %v2346 = vpop.f32.mrb[0].mxu0
      %2347 = vmatprep.mubr.bf16.mxu0 %v2224
      %2348 = vmatmul.mubr.bf16.gmra.mrb[0].mxu0 %v1652
      %v2349 = vpop.f32.mrb[0].mxu0
      %v2350 = vadd.f32 %v1981, %v2349
      %v2351 = vpop.f32.mrb[0].mxu0
      %v2352 = vpop.f32.mrb[0].mxu0
      %v2353 = vadd.f32 %v1984, %v2352
      %v2354 = vpop.f32.mrb[0].mxu0
      %2355 = vmatprep.mubr.bf16.mxu0 %v2227
      %2356 = vmatmul.mubr.bf16.gmra.mrb[0].mxu0 %v1654
      %v2357 = vpop.f32.mrb[0].mxu0
      %v2358 = vadd.f32 %v1989, %v2357
      %v2359 = vpop.f32.mrb[0].mxu0
      %v2360 = vpop.f32.mrb[0].mxu0
      %v2361 = vadd.f32 %v1992, %v2360
      %v2362 = vpop.f32.mrb[0].mxu0
      %2363 = vmatprep.mubr.bf16.mxu0 %v2230
      %2364 = vmatmul.mubr.bf16.gmra.mrb[0].mxu0 %v1656
      %v2365 = vpop.f32.mrb[0].mxu0
      %v2366 = vadd.f32 %v1997, %v2365
      %v2367 = vpop.f32.mrb[0].mxu0
      %v2368 = vpop.f32.mrb[0].mxu0
      %v2369 = vadd.f32 %v2000, %v2368
      %v2370 = vpop.f32.mrb[0].mxu0
      %2371 = vmatprep.mubr.bf16.mxu0 %v2233
      %2372 = vmatmul.mubr.bf16.gmra.mrb[0].mxu0 %v1658
      %v2373 = vpop.f32.mrb[0].mxu0
      %v2374 = vadd.f32 %v2005, %v2373
      %v2375 = vpop.f32.mrb[0].mxu0
      %v2376 = vpop.f32.mrb[0].mxu0
      %v2377 = vadd.f32 %v2008, %v2376
      %v2378 = vpop.f32.mrb[0].mxu0
      %2379 = vmatprep.mubr.bf16.mxu0 %v2236
      %2380 = vmatmul.mubr.bf16.gmra.mrb[0].mxu0 %v1660
      %v2381 = vpop.f32.mrb[0].mxu0
      %v2382 = vadd.f32 %v2013, %v2381
      %v2383 = vpop.f32.mrb[0].mxu0
      %v2384 = vpop.f32.mrb[0].mxu0
      %v2385 = vadd.f32 %v2016, %v2384
      %v2386 = vpop.f32.mrb[0].mxu0
      %2387 = vmatprep.mubr.bf16.mxu0 %v2239
      %2388 = vmatmul.mubr.bf16.gmra.mrb[0].mxu0 %v1662
      %v2389 = vpop.f32.mrb[0].mxu0
      %v2390 = vadd.f32 %v2021, %v2389
      %v2391 = vpop.f32.mrb[0].mxu0
      %v2392 = vpop.f32.mrb[0].mxu0
      %v2393 = vadd.f32 %v2024, %v2392
      %v2394 = vpop.f32.mrb[0].mxu0
      %2395 = vmatprep.mubr.bf16.mxu0 %v2242
      %2396 = vmatmul.mubr.bf16.gmra.mrb[0].mxu0 %v1664
      %v2397 = vpop.f32.mrb[0].mxu0
      %v2398 = vadd.f32 %v2029, %v2397
      %v2399 = vpop.f32.mrb[0].mxu0
      %v2400 = vpop.f32.mrb[0].mxu0
      %v2401 = vadd.f32 %v2032, %v2400
      %v2402 = vpop.f32.mrb[0].mxu0
      %2403 = vmatprep.mubr.bf16.mxu0 %v2245
      %2404 = vmatmul.mubr.bf16.gmra.mrb[0].mxu0 %v1666
      %v2405 = vpop.f32.mrb[0].mxu0
      %v2406 = vadd.f32 %v2037, %v2405
      %v2407 = vpop.f32.mrb[0].mxu0
      %v2408 = vpop.f32.mrb[0].mxu0
      %v2409 = vadd.f32 %v2040, %v2408
      %v2410 = vpop.f32.mrb[0].mxu0
      %2411 = vmatprep.mubr.bf16.mxu0 %v2248
      %2412 = vmatmul.mubr.bf16.gmra.mrb[0].mxu0 %v1668
      %v2413 = vpop.f32.mrb[0].mxu0
      %v2414 = vadd.f32 %v2045, %v2413
      %v2415 = vpop.f32.mrb[0].mxu0
      %v2416 = vpop.f32.mrb[0].mxu0
      %v2417 = vadd.f32 %v2048, %v2416
      %v2418 = vpop.f32.mrb[0].mxu0
      %2419 = vmatprep.mubr.bf16.mxu0 %v2251
      %2420 = vmatmul.mubr.bf16.gmra.mrb[0].mxu0 %v1670
      %v2421 = vpop.f32.mrb[0].mxu0
      %v2422 = vadd.f32 %v2053, %v2421
      %v2423 = vpop.f32.mrb[0].mxu0
      %v2424 = vpop.f32.mrb[0].mxu0
      %v2425 = vadd.f32 %v2056, %v2424
      %v2426 = vpop.f32.mrb[0].mxu0
      %2427 = vmatprep.mubr.bf16.mxu0 %v2254
      %2428 = vmatmul.mubr.bf16.gmra.mrb[0].mxu0 %v1672
      %v2429 = vpop.f32.mrb[0].mxu0
      %v2430 = vadd.f32 %v2061, %v2429
      %v2431 = vpop.f32.mrb[0].mxu0
      %v2432 = vpop.f32.mrb[0].mxu0
      %v2433 = vadd.f32 %v2064, %v2432
      %v2434 = vpop.f32.mrb[0].mxu0
      %2435 = vmatprep.mubr.bf16.mxu0 %v2257
      %2436 = vmatmul.mubr.bf16.gmra.mrb[0].mxu0 %v1674
      %v2437 = vpop.f32.mrb[0].mxu0
      %v2438 = vadd.f32 %v2069, %v2437
      %v2439 = vpop.f32.mrb[0].mxu0
      %v2440 = vpop.f32.mrb[0].mxu0
      %v2441 = vadd.f32 %v2072, %v2440
      %v2442 = vpop.f32.mrb[0].mxu0
      %2443 = vmatprep.mubr.bf16.mxu0 %v2260
      %2444 = vmatmul.mubr.bf16.gmra.mrb[0].mxu0 %v1676
      %v2445 = vpop.f32.mrb[0].mxu0
      %v2446 = vadd.f32 %v2077, %v2445
      %v2447 = vpop.f32.mrb[0].mxu0
      %v2448 = vpop.f32.mrb[0].mxu0
      %v2449 = vadd.f32 %v2080, %v2448
      %v2450 = vpop.f32.mrb[0].mxu0
      %2451 = vmatprep.mubr.bf16.mxu0 %v2263
      %2452 = vmatmul.mubr.bf16.gmra.mrb[0].mxu0 %v1678
      %v2453 = vpop.f32.mrb[0].mxu0
      %v2454 = vadd.f32 %v2085, %v2453
      %v2455 = vpop.f32.mrb[0].mxu0
      %v2456 = vpop.f32.mrb[0].mxu0
      %v2457 = vadd.f32 %v2088, %v2456
      %v2458 = vpop.f32.mrb[0].mxu0
      %2459 = vmatprep.mubr.bf16.mxu0 %v2266
      %2460 = vmatmul.mubr.bf16.gmra.mrb[0].mxu0 %v1680
      %v2461 = vpop.f32.mrb[0].mxu0
      %v2462 = vadd.f32 %v2093, %v2461
      %v2463 = vpop.f32.mrb[0].mxu0
      %v2464 = vpop.f32.mrb[0].mxu0
      %v2465 = vadd.f32 %v2096, %v2464
      %v2466 = vpop.f32.mrb[0].mxu0
      %2467 = vmatprep.mubr.bf16.mxu0 %v2269
      %2468 = vmatmul.mubr.bf16.gmra.mrb[0].mxu0 %v1682
      %v2469 = vpop.f32.mrb[0].mxu0
      %v2470 = vadd.f32 %v2101, %v2469
      %v2471 = vpop.f32.mrb[0].mxu0
      %v2472 = vpop.f32.mrb[0].mxu0
      %v2473 = vadd.f32 %v2104, %v2472
      %v2474 = vpop.f32.mrb[0].mxu0
      %2475 = vmatprep.mubr.bf16.mxu0 %v2272
      %2476 = vmatmul.mubr.bf16.gmra.mrb[0].mxu0 %v1684
      %v2477 = vpop.f32.mrb[0].mxu0
      %v2478 = vadd.f32 %v2109, %v2477
      %v2479 = vpop.f32.mrb[0].mxu0
      %v2480 = vpop.f32.mrb[0].mxu0
      %v2481 = vadd.f32 %v2112, %v2480
      %v2482 = vpop.f32.mrb[0].mxu0
      %2483 = vmatprep.mubr.bf16.mxu0 %v2275
      %2484 = vmatmul.mubr.bf16.gmra.mrb[0].mxu0 %v1686
      %v2485 = vpop.f32.mrb[0].mxu0
      %v2486 = vadd.f32 %v2117, %v2485
      %v2487 = vpop.f32.mrb[0].mxu0
      %v2488 = vpop.f32.mrb[0].mxu0
      %v2489 = vadd.f32 %v2120, %v2488
      %v2490 = vpop.f32.mrb[0].mxu0
      %2491 = vmatprep.mubr.bf16.mxu0 %v2278
      %2492 = vmatmul.mubr.bf16.gmra.mrb[0].mxu0 %v1688
      %v2493 = vpop.f32.mrb[0].mxu0
      %v2494 = vadd.f32 %v2125, %v2493
      %v2495 = vpop.f32.mrb[0].mxu0
      %v2496 = vpop.f32.mrb[0].mxu0
      %v2497 = vadd.f32 %v2128, %v2496
      %v2498 = vpop.f32.mrb[0].mxu0
      %2499 = vmatprep.mubr.bf16.mxu0 %v2281
      %2500 = vmatmul.mubr.bf16.gmra.mrb[0].mxu0 %v1690
      %v2501 = vpop.f32.mrb[0].mxu0
      %v2502 = vadd.f32 %v2133, %v2501
      %v2503 = vpop.f32.mrb[0].mxu0
      %v2504 = vpop.f32.mrb[0].mxu0
      %v2505 = vadd.f32 %v2136, %v2504
      %v2506 = vpop.f32.mrb[0].mxu0
      %2507 = vdwg.mxu0
      %v2511 = vrot.slane %v1084, 1
      %v2512 = vsel %vm1208, %v1699, %v2511
      %v2513 = vrot.slane %v1085, 1
      %v2514 = vsel %vm1208, %v2511, %v2513
      %v2515 = vrot.slane %v1086, 1
      %v2516 = vsel %vm1208, %v2513, %v2515
      %2517 = vrot.lane.b32.xlu0 %v2512, 64
      %v2518 = vpop.permute.xlu0 %2517
      %2519 = vrot.lane.b32.xlu0 %v2514, 64
      %v2520 = vpop.permute.xlu0 %2519
      %2521 = vrot.lane.b32.xlu0 %v2516, 64
      %v2522 = vpop.permute.xlu0 %2521
      %v2526 = vrot.slane %v1084, 2
      %v2527 = vsel %vm1450, %v1714, %v2526
      %v2528 = vrot.slane %v1085, 2
      %v2529 = vsel %vm1450, %v2526, %v2528
      %v2530 = vrot.slane %v1086, 2
      %v2531 = vsel %vm1450, %v2528, %v2530
      %v2535 = vsel %vm487, %v1083, %v2518
      %v2536 = vsel %vm487, %v1084, %v2520
      %v2537 = vsel %vm487, %v1085, %v2522
      %v2538 = vpack.c.bf16 %v1720, %v1719
      %v2539 = vpack.c.bf16 %v1713, %v1711
      %v2540 = vpack.c.bf16 %v2535, %v1721
      %v2541 = vpack.c.bf16 %v2527, %v1715
      %v2542 = vpack.c.bf16 %v2537, %v2536
      %v2543 = vpack.c.bf16 %v2531, %v2529
      %v2568 = vunpack.c.l.b16 %v1135
      %v2569 = vunpack.c.l.b16 %v1136
      %v2570 = vunpack.c.l.b16 %v1137
      %v2571 = vunpack.c.l.b16 %v1138
      %v2572 = vunpack.c.l.b16 %v1139
      %v2573 = vunpack.c.l.b16 %v1140
      %v2574 = vunpack.c.l.b16 %v1141
      %v2575 = vunpack.c.l.b16 %v1142
      %v2576 = vunpack.c.l.b16 %v1143
      %v2577 = vunpack.c.l.b16 %v1144
      %v2578 = vunpack.c.l.b16 %v1145
      %v2579 = vunpack.c.l.b16 %v1146
      %v2580 = vunpack.c.l.b16 %v1147
      %v2581 = vunpack.c.l.b16 %v1148
      %v2582 = vunpack.c.l.b16 %v1149
      %v2583 = vunpack.c.l.b16 %v1150
      %v2584 = vunpack.c.l.b16 %v1151
      %v2585 = vunpack.c.l.b16 %v1152
      %v2586 = vunpack.c.l.b16 %v1153
      %v2587 = vunpack.c.l.b16 %v1154
      %v2588 = vunpack.c.l.b16 %v1155
      %v2589 = vunpack.c.l.b16 %v1156
      %v2590 = vunpack.c.l.b16 %v1157
      %v2591 = vunpack.c.l.b16 %v1158
      %v2592 = vpack.c.b16 %v2569, %v2568
      %v2593 = vpack.c.b16 %v2571, %v2570
      %v2594 = vpack.c.b16 %v2573, %v2572
      %v2595 = vpack.c.b16 %v2575, %v2574
      %v2596 = vpack.c.b16 %v2577, %v2576
      %v2597 = vpack.c.b16 %v2579, %v2578
      %v2598 = vpack.c.b16 %v2581, %v2580
      %v2599 = vpack.c.b16 %v2583, %v2582
      %v2600 = vpack.c.b16 %v2585, %v2584
      %v2601 = vpack.c.b16 %v2587, %v2586
      %v2602 = vpack.c.b16 %v2589, %v2588
      %v2603 = vpack.c.b16 %v2591, %v2590
      %v2617 = vsel %vm487, %v2539, 0
      %v2620 = vsel %vm487, %v2541, 0
      %v2623 = vsel %vm487, %v2543, 0
      %2625 = vmatprep.subr.bf16.mxu0 0
      %2626 = vmatpush1.bf16.msra.mxu0 %v2592
      %2627 = vmatprep.subr.bf16.mxu0 0
      %2628 = vmatpush1.bf16.msra.mxu0 %v2593
      %2629 = vmatprep.subr.bf16.mxu0 0
      %2630 = vmatpush1.bf16.msra.mxu0 %v2594
      %2631 = vmatprep.subr.bf16.mxu0 0
      %2632 = vmatpush1.bf16.msra.mxu0 %v2595
      %2633 = vmatprep.subr.bf16.mxu0 0
      %2634 = vmatpush1.bf16.msra.mxu0 %v2596
      %2635 = vmatprep.subr.bf16.mxu0 0
      %2636 = vmatpush1.bf16.msra.mxu0 %v2597
      %2637 = vmatprep.subr.bf16.mxu0 0
      %2638 = vmatpush1.bf16.msra.mxu0 %v2598
      %2639 = vmatprep.subr.bf16.mxu0 0
      %2640 = vmatpush1.bf16.msra.mxu0 %v2599
      %2641 = vmatprep.subr.bf16.mxu0 0
      %2642 = vmatpush1.bf16.msra.mxu0 %v2600
      %2643 = vmatprep.subr.bf16.mxu0 0
      %2644 = vmatpush1.bf16.msra.mxu0 %v2601
      %2645 = vmatprep.subr.bf16.mxu0 0
      %2646 = vmatpush1.bf16.msra.mxu0 %v2602
      %2647 = vmatprep.subr.bf16.mxu0 0
      %2648 = vmatpush1.bf16.msra.mxu0 %v2603
      %2649 = vmatprep.subr.bf16.mxu0 0
      %2650 = vmatpush1.bf16.msra.mxu0 0
      %2651 = vmatprep.subr.bf16.mxu0 0
      %2652 = vmatpush1.bf16.msra.mxu0 0
      %2653 = vmatprep.subr.bf16.mxu0 0
      %2654 = vmatpush1.bf16.msra.mxu0 0
      %2655 = vmatprep.subr.bf16.mxu0 0
      %2656 = vmatpush1.bf16.msra.mxu0 0
      %2657 = vmatprep.mubr.bf16.mxu0 %v2221
      %2658 = vmatmul.mubr.bf16.gmra.mrb[0].mxu0 %v1650
      %v2659 = vpop.f32.mrb[0].mxu0
      %v2660 = vadd.f32 0.0, %v2659
      %v2661 = vpop.f32.mrb[0].mxu0
      %v2662 = vpop.f32.mrb[0].mxu0
      %v2663 = vadd.f32 0.0, %v2662
      %v2664 = vpop.f32.mrb[0].mxu0
      %2665 = vmatprep.mubr.bf16.mxu0 %v2224
      %2666 = vmatmul.mubr.bf16.gmra.mrb[0].mxu0 %v1652
      %v2667 = vpop.f32.mrb[0].mxu0
      %v2668 = vadd.f32 0.0, %v2667
      %v2669 = vpop.f32.mrb[0].mxu0
      %v2670 = vpop.f32.mrb[0].mxu0
      %v2671 = vadd.f32 0.0, %v2670
      %v2672 = vpop.f32.mrb[0].mxu0
      %2673 = vmatprep.mubr.bf16.mxu0 %v2227
      %2674 = vmatmul.mubr.bf16.gmra.mrb[0].mxu0 %v1654
      %v2675 = vpop.f32.mrb[0].mxu0
      %v2676 = vadd.f32 0.0, %v2675
      %v2677 = vpop.f32.mrb[0].mxu0
      %v2678 = vpop.f32.mrb[0].mxu0
      %v2679 = vadd.f32 0.0, %v2678
      %v2680 = vpop.f32.mrb[0].mxu0
      %2681 = vmatprep.mubr.bf16.mxu0 %v2230
      %2682 = vmatmul.mubr.bf16.gmra.mrb[0].mxu0 %v1656
      %v2683 = vpop.f32.mrb[0].mxu0
      %v2684 = vadd.f32 0.0, %v2683
      %v2685 = vpop.f32.mrb[0].mxu0
      %v2686 = vpop.f32.mrb[0].mxu0
      %v2687 = vadd.f32 0.0, %v2686
      %v2688 = vpop.f32.mrb[0].mxu0
      %2689 = vmatprep.mubr.bf16.mxu0 %v2233
      %2690 = vmatmul.mubr.bf16.gmra.mrb[0].mxu0 %v1658
      %v2691 = vpop.f32.mrb[0].mxu0
      %v2692 = vadd.f32 0.0, %v2691
      %v2693 = vpop.f32.mrb[0].mxu0
      %v2694 = vpop.f32.mrb[0].mxu0
      %v2695 = vadd.f32 0.0, %v2694
      %v2696 = vpop.f32.mrb[0].mxu0
      %2697 = vmatprep.mubr.bf16.mxu0 %v2236
      %2698 = vmatmul.mubr.bf16.gmra.mrb[0].mxu0 %v1660
      %v2699 = vpop.f32.mrb[0].mxu0
      %v2700 = vadd.f32 0.0, %v2699
      %v2701 = vpop.f32.mrb[0].mxu0
      %v2702 = vpop.f32.mrb[0].mxu0
      %v2703 = vadd.f32 0.0, %v2702
      %v2704 = vpop.f32.mrb[0].mxu0
      %2705 = vmatprep.mubr.bf16.mxu0 %v2239
      %2706 = vmatmul.mubr.bf16.gmra.mrb[0].mxu0 %v1662
      %v2707 = vpop.f32.mrb[0].mxu0
      %v2708 = vadd.f32 0.0, %v2707
      %v2709 = vpop.f32.mrb[0].mxu0
      %v2710 = vpop.f32.mrb[0].mxu0
      %v2711 = vadd.f32 0.0, %v2710
      %v2712 = vpop.f32.mrb[0].mxu0
      %2713 = vmatprep.mubr.bf16.mxu0 %v2242
      %2714 = vmatmul.mubr.bf16.gmra.mrb[0].mxu0 %v1664
      %v2715 = vpop.f32.mrb[0].mxu0
      %v2716 = vadd.f32 0.0, %v2715
      %v2717 = vpop.f32.mrb[0].mxu0
      %v2718 = vpop.f32.mrb[0].mxu0
      %v2719 = vadd.f32 0.0, %v2718
      %v2720 = vpop.f32.mrb[0].mxu0
      %2721 = vmatprep.mubr.bf16.mxu0 %v2245
      %2722 = vmatmul.mubr.bf16.gmra.mrb[0].mxu0 %v1666
      %v2723 = vpop.f32.mrb[0].mxu0
      %v2724 = vadd.f32 0.0, %v2723
      %v2725 = vpop.f32.mrb[0].mxu0
      %v2726 = vpop.f32.mrb[0].mxu0
      %v2727 = vadd.f32 0.0, %v2726
      %v2728 = vpop.f32.mrb[0].mxu0
      %2729 = vmatprep.mubr.bf16.mxu0 %v2248
      %2730 = vmatmul.mubr.bf16.gmra.mrb[0].mxu0 %v1668
      %v2731 = vpop.f32.mrb[0].mxu0
      %v2732 = vadd.f32 0.0, %v2731
      %v2733 = vpop.f32.mrb[0].mxu0
      %v2734 = vpop.f32.mrb[0].mxu0
      %v2735 = vadd.f32 0.0, %v2734
      %v2736 = vpop.f32.mrb[0].mxu0
      %2737 = vmatprep.mubr.bf16.mxu0 %v2251
      %2738 = vmatmul.mubr.bf16.gmra.mrb[0].mxu0 %v1670
      %v2739 = vpop.f32.mrb[0].mxu0
      %v2740 = vadd.f32 0.0, %v2739
      %v2741 = vpop.f32.mrb[0].mxu0
      %v2742 = vpop.f32.mrb[0].mxu0
      %v2743 = vadd.f32 0.0, %v2742
      %v2744 = vpop.f32.mrb[0].mxu0
      %2745 = vmatprep.mubr.bf16.mxu0 %v2254
      %2746 = vmatmul.mubr.bf16.gmra.mrb[0].mxu0 %v1672
      %v2747 = vpop.f32.mrb[0].mxu0
      %v2748 = vadd.f32 0.0, %v2747
      %v2749 = vpop.f32.mrb[0].mxu0
      %v2750 = vpop.f32.mrb[0].mxu0
      %v2751 = vadd.f32 0.0, %v2750
      %v2752 = vpop.f32.mrb[0].mxu0
      %2753 = vmatprep.mubr.bf16.mxu0 %v2257
      %2754 = vmatmul.mubr.bf16.gmra.mrb[0].mxu0 %v1674
      %v2755 = vpop.f32.mrb[0].mxu0
      %v2756 = vadd.f32 0.0, %v2755
      %v2757 = vpop.f32.mrb[0].mxu0
      %v2758 = vpop.f32.mrb[0].mxu0
      %v2759 = vadd.f32 0.0, %v2758
      %v2760 = vpop.f32.mrb[0].mxu0
      %2761 = vmatprep.mubr.bf16.mxu0 %v2260
      %2762 = vmatmul.mubr.bf16.gmra.mrb[0].mxu0 %v1676
      %v2763 = vpop.f32.mrb[0].mxu0
      %v2764 = vadd.f32 0.0, %v2763
      %v2765 = vpop.f32.mrb[0].mxu0
      %v2766 = vpop.f32.mrb[0].mxu0
      %v2767 = vadd.f32 0.0, %v2766
      %v2768 = vpop.f32.mrb[0].mxu0
      %2769 = vmatprep.mubr.bf16.mxu0 %v2263
      %2770 = vmatmul.mubr.bf16.gmra.mrb[0].mxu0 %v1678
      %v2771 = vpop.f32.mrb[0].mxu0
      %v2772 = vadd.f32 0.0, %v2771
      %v2773 = vpop.f32.mrb[0].mxu0
      %v2774 = vpop.f32.mrb[0].mxu0
      %v2775 = vadd.f32 0.0, %v2774
      %v2776 = vpop.f32.mrb[0].mxu0
      %2777 = vmatprep.mubr.bf16.mxu0 %v2266
      %2778 = vmatmul.mubr.bf16.gmra.mrb[0].mxu0 %v1680
      %v2779 = vpop.f32.mrb[0].mxu0
      %v2780 = vadd.f32 0.0, %v2779
      %v2781 = vpop.f32.mrb[0].mxu0
      %v2782 = vpop.f32.mrb[0].mxu0
      %v2783 = vadd.f32 0.0, %v2782
      %v2784 = vpop.f32.mrb[0].mxu0
      %2785 = vmatprep.mubr.bf16.mxu0 %v2269
      %2786 = vmatmul.mubr.bf16.gmra.mrb[0].mxu0 %v1682
      %v2787 = vpop.f32.mrb[0].mxu0
      %v2788 = vadd.f32 0.0, %v2787
      %v2789 = vpop.f32.mrb[0].mxu0
      %v2790 = vpop.f32.mrb[0].mxu0
      %v2791 = vadd.f32 0.0, %v2790
      %v2792 = vpop.f32.mrb[0].mxu0
      %2793 = vmatprep.mubr.bf16.mxu0 %v2272
      %2794 = vmatmul.mubr.bf16.gmra.mrb[0].mxu0 %v1684
      %v2795 = vpop.f32.mrb[0].mxu0
      %v2796 = vadd.f32 0.0, %v2795
      %v2797 = vpop.f32.mrb[0].mxu0
      %v2798 = vpop.f32.mrb[0].mxu0
      %v2799 = vadd.f32 0.0, %v2798
      %v2800 = vpop.f32.mrb[0].mxu0
      %2801 = vmatprep.mubr.bf16.mxu0 %v2275
      %2802 = vmatmul.mubr.bf16.gmra.mrb[0].mxu0 %v1686
      %v2803 = vpop.f32.mrb[0].mxu0
      %v2804 = vadd.f32 0.0, %v2803
      %v2805 = vpop.f32.mrb[0].mxu0
      %v2806 = vpop.f32.mrb[0].mxu0
      %v2807 = vadd.f32 0.0, %v2806
      %v2808 = vpop.f32.mrb[0].mxu0
      %2809 = vmatprep.mubr.bf16.mxu0 %v2278
      %2810 = vmatmul.mubr.bf16.gmra.mrb[0].mxu0 %v1688
      %v2811 = vpop.f32.mrb[0].mxu0
      %v2812 = vadd.f32 0.0, %v2811
      %v2813 = vpop.f32.mrb[0].mxu0
      %v2814 = vpop.f32.mrb[0].mxu0
      %v2815 = vadd.f32 0.0, %v2814
      %v2816 = vpop.f32.mrb[0].mxu0
      %2817 = vmatprep.mubr.bf16.mxu0 %v2281
      %2818 = vmatmul.mubr.bf16.gmra.mrb[0].mxu0 %v1690
      %v2819 = vpop.f32.mrb[0].mxu0
      %v2820 = vadd.f32 0.0, %v2819
      %v2821 = vpop.f32.mrb[0].mxu0
      %v2822 = vpop.f32.mrb[0].mxu0
      %v2823 = vadd.f32 0.0, %v2822
      %v2824 = vpop.f32.mrb[0].mxu0
      %2825 = vmatprep.mubr.bf16.mxu0 %v2617
      %2826 = vmatmul.mubr.bf16.gmra.mrb[0].mxu0 %v2538
      %v2827 = vpop.f32.mrb[0].mxu0
      %v2828 = vadd.f32 0.0, %v2827
      %v2829 = vpop.f32.mrb[0].mxu0
      %v2830 = vpop.f32.mrb[0].mxu0
      %v2831 = vadd.f32 0.0, %v2830
      %v2832 = vpop.f32.mrb[0].mxu0
      %2833 = vmatprep.mubr.bf16.mxu0 %v2620
      %2834 = vmatmul.mubr.bf16.gmra.mrb[0].mxu0 %v2540
      %v2835 = vpop.f32.mrb[0].mxu0
      %v2836 = vadd.f32 0.0, %v2835
      %v2837 = vpop.f32.mrb[0].mxu0
      %v2838 = vpop.f32.mrb[0].mxu0
      %v2839 = vadd.f32 0.0, %v2838
      %v2840 = vpop.f32.mrb[0].mxu0
      %2841 = vmatprep.mubr.bf16.mxu0 %v2623
      %2842 = vmatmul.mubr.bf16.gmra.mrb[0].mxu0 %v2542
      %v2843 = vpop.f32.mrb[0].mxu0
      %v2844 = vadd.f32 0.0, %v2843
      %v2845 = vpop.f32.mrb[0].mxu0
      %v2846 = vpop.f32.mrb[0].mxu0
      %v2847 = vadd.f32 0.0, %v2846
      %v2848 = vpop.f32.mrb[0].mxu0
      %2849 = vdwg.mxu0
      %v2850 = vadd.f32 %v2318, %v2660
      %v2851 = vadd.f32 %v2321, %v2663
      %v2852 = vadd.f32 %v2326, %v2668
      %v2853 = vadd.f32 %v2329, %v2671
      %v2854 = vadd.f32 %v2334, %v2676
      %v2855 = vadd.f32 %v2337, %v2679
      %v2856 = vadd.f32 %v2342, %v2684
      %v2857 = vadd.f32 %v2345, %v2687
      %v2858 = vadd.f32 %v2350, %v2692
      %v2859 = vadd.f32 %v2353, %v2695
      %v2860 = vadd.f32 %v2358, %v2700
      %v2861 = vadd.f32 %v2361, %v2703
      %v2862 = vadd.f32 %v2366, %v2708
      %v2863 = vadd.f32 %v2369, %v2711
      %v2864 = vadd.f32 %v2374, %v2716
      %v2865 = vadd.f32 %v2377, %v2719
      %v2866 = vadd.f32 %v2382, %v2724
      %v2867 = vadd.f32 %v2385, %v2727
      %v2868 = vadd.f32 %v2390, %v2732
      %v2869 = vadd.f32 %v2393, %v2735
      %v2870 = vadd.f32 %v2398, %v2740
      %v2871 = vadd.f32 %v2401, %v2743
      %v2872 = vadd.f32 %v2406, %v2748
      %v2873 = vadd.f32 %v2409, %v2751
      %v2874 = vadd.f32 %v2414, %v2756
      %v2875 = vadd.f32 %v2417, %v2759
      %v2876 = vadd.f32 %v2422, %v2764
      %v2877 = vadd.f32 %v2425, %v2767
      %v2878 = vadd.f32 %v2430, %v2772
      %v2879 = vadd.f32 %v2433, %v2775
      %v2880 = vadd.f32 %v2438, %v2780
      %v2881 = vadd.f32 %v2441, %v2783
      %v2882 = vadd.f32 %v2446, %v2788
      %v2883 = vadd.f32 %v2449, %v2791
      %v2884 = vadd.f32 %v2454, %v2796
      %v2885 = vadd.f32 %v2457, %v2799
      %v2886 = vadd.f32 %v2462, %v2804
      %v2887 = vadd.f32 %v2465, %v2807
      %v2888 = vadd.f32 %v2470, %v2812
      %v2889 = vadd.f32 %v2473, %v2815
      %v2890 = vadd.f32 %v2478, %v2820
      %v2891 = vadd.f32 %v2481, %v2823
      %v2892 = vadd.f32 %v2486, %v2828
      %v2893 = vadd.f32 %v2489, %v2831
      %v2894 = vadd.f32 %v2494, %v2836
      %v2895 = vadd.f32 %v2497, %v2839
      %v2896 = vadd.f32 %v2502, %v2844
      %v2897 = vadd.f32 %v2505, %v2847
      %v2898 = vld [vmem:[%s6] sm:$0x1]
      %v2900 = vlaneseq
      %v2901 = vshrl.u32 %v2900, 7
      %v2902 = vsub.s32 0, %v2901
      %v2903 = vrot.slane %v2898, %v2902
      %v2905 = vadd.f32 %v2850, %v2903
      %v2906 = vadd.f32 %v2851, %v2903
      %v2907 = vadd.f32 %v2852, %v2903
      %v2908 = vadd.f32 %v2853, %v2903
      %v2909 = vadd.f32 %v2854, %v2903
      %v2910 = vadd.f32 %v2855, %v2903
      %v2911 = vadd.f32 %v2856, %v2903
      %v2912 = vadd.f32 %v2857, %v2903
      %v2913 = vadd.f32 %v2858, %v2903
      %v2914 = vadd.f32 %v2859, %v2903
      %v2915 = vadd.f32 %v2860, %v2903
      %v2916 = vadd.f32 %v2861, %v2903
      %v2917 = vadd.f32 %v2862, %v2903
      %v2918 = vadd.f32 %v2863, %v2903
      %v2919 = vadd.f32 %v2864, %v2903
      %v2920 = vadd.f32 %v2865, %v2903
      %v2921 = vadd.f32 %v2866, %v2903
      %v2922 = vadd.f32 %v2867, %v2903
      %v2923 = vadd.f32 %v2868, %v2903
      %v2924 = vadd.f32 %v2869, %v2903
      %v2925 = vadd.f32 %v2870, %v2903
      %v2926 = vadd.f32 %v2871, %v2903
      %v2927 = vadd.f32 %v2872, %v2903
      %v2928 = vadd.f32 %v2873, %v2903
      %v2929 = vadd.f32 %v2874, %v2903
      %v2930 = vadd.f32 %v2875, %v2903
      %v2931 = vadd.f32 %v2876, %v2903
      %v2932 = vadd.f32 %v2877, %v2903
      %v2933 = vadd.f32 %v2878, %v2903
      %v2934 = vadd.f32 %v2879, %v2903
      %v2935 = vadd.f32 %v2880, %v2903
      %v2936 = vadd.f32 %v2881, %v2903
      %v2937 = vadd.f32 %v2882, %v2903
      %v2938 = vadd.f32 %v2883, %v2903
      %v2939 = vadd.f32 %v2884, %v2903
      %v2940 = vadd.f32 %v2885, %v2903
      %v2941 = vadd.f32 %v2886, %v2903
      %v2942 = vadd.f32 %v2887, %v2903
      %v2943 = vadd.f32 %v2888, %v2903
      %v2944 = vadd.f32 %v2889, %v2903
      %v2945 = vadd.f32 %v2890, %v2903
      %v2946 = vadd.f32 %v2891, %v2903
      %v2947 = vadd.f32 %v2892, %v2903
      %v2948 = vadd.f32 %v2893, %v2903
      %v2949 = vadd.f32 %v2894, %v2903
      %v2950 = vadd.f32 %v2895, %v2903
      %v2951 = vadd.f32 %v2896, %v2903
      %v2952 = vadd.f32 %v2897, %v2903
      %2953 = vst.msk [vmem:[%s443] sm:$0xff] %vm487, %v2905
      %2954 = vst.msk [vmem:[%s443 + $0x8] sm:$0xff] %vm487, %v2906
      %2955 = vst.msk [vmem:[%s443 + $0x10] sm:$0xff] %vm487, %v2907
      %2956 = vst.msk [vmem:[%s443 + $0x18] sm:$0xff] %vm487, %v2908
      %2957 = vst.msk [vmem:[%s443 + $0x20] sm:$0xff] %vm487, %v2909
      %2958 = vst.msk [vmem:[%s443 + $0x28] sm:$0xff] %vm487, %v2910
      %2959 = vst.msk [vmem:[%s443 + $0x30] sm:$0xff] %vm487, %v2911
      %2960 = vst.msk [vmem:[%s443 + $0x38] sm:$0xff] %vm487, %v2912
      %2961 = vst.msk [vmem:[%s443 + $0x40] sm:$0xff] %vm487, %v2913
      %2962 = vst.msk [vmem:[%s443 + $0x48] sm:$0xff] %vm487, %v2914
      %2963 = vst.msk [vmem:[%s443 + $0x50] sm:$0xff] %vm487, %v2915
      %2964 = vst.msk [vmem:[%s443 + $0x58] sm:$0xff] %vm487, %v2916
      %2965 = vst.msk [vmem:[%s443 + $0x60] sm:$0xff] %vm487, %v2917
      %2966 = vst.msk [vmem:[%s443 + $0x68] sm:$0xff] %vm487, %v2918
      %2967 = vst.msk [vmem:[%s443 + $0x70] sm:$0xff] %vm487, %v2919
      %2968 = vst.msk [vmem:[%s443 + $0x78] sm:$0xff] %vm487, %v2920
      %2969 = vst.msk [vmem:[%s443 + $0x80] sm:$0xff] %vm487, %v2921
      %2970 = vst.msk [vmem:[%s443 + $0x88] sm:$0xff] %vm487, %v2922
      %2971 = vst.msk [vmem:[%s443 + $0x90] sm:$0xff] %vm487, %v2923
      %2972 = vst.msk [vmem:[%s443 + $0x98] sm:$0xff] %vm487, %v2924
      %2973 = vst.msk [vmem:[%s443 + $0xa0] sm:$0xff] %vm487, %v2925
      %2974 = vst.msk [vmem:[%s443 + $0xa8] sm:$0xff] %vm487, %v2926
      %2975 = vst.msk [vmem:[%s443 + $0xb0] sm:$0xff] %vm487, %v2927
      %2976 = vst.msk [vmem:[%s443 + $0xb8] sm:$0xff] %vm487, %v2928
      %2977 = vst.msk [vmem:[%s443 + $0xc0] sm:$0xff] %vm487, %v2929
      %2978 = vst.msk [vmem:[%s443 + $0xc8] sm:$0xff] %vm487, %v2930
      %2979 = vst.msk [vmem:[%s443 + $0xd0] sm:$0xff] %vm487, %v2931
      %2980 = vst.msk [vmem:[%s443 + $0xd8] sm:$0xff] %vm487, %v2932
      %2981 = vst.msk [vmem:[%s443 + $0xe0] sm:$0xff] %vm487, %v2933
      %2982 = vst.msk [vmem:[%s443 + $0xe8] sm:$0xff] %vm487, %v2934
      %2983 = vst.msk [vmem:[%s443 + $0xf0] sm:$0xff] %vm487, %v2935
      %2984 = vst.msk [vmem:[%s443 + $0xf8] sm:$0xff] %vm487, %v2936
      %2985 = vst.msk [vmem:[%s443 + $0x100] sm:$0xff] %vm487, %v2937
      %2986 = vst.msk [vmem:[%s443 + $0x108] sm:$0xff] %vm487, %v2938
      %2987 = vst.msk [vmem:[%s443 + $0x110] sm:$0xff] %vm487, %v2939
      %2988 = vst.msk [vmem:[%s443 + $0x118] sm:$0xff] %vm487, %v2940
      %2989 = vst.msk [vmem:[%s443 + $0x120] sm:$0xff] %vm487, %v2941
      %2990 = vst.msk [vmem:[%s443 + $0x128] sm:$0xff] %vm487, %v2942
      %2991 = vst.msk [vmem:[%s443 + $0x130] sm:$0xff] %vm487, %v2943
      %2992 = vst.msk [vmem:[%s443 + $0x138] sm:$0xff] %vm487, %v2944
      %2993 = vst.msk [vmem:[%s443 + $0x140] sm:$0xff] %vm487, %v2945
      %2994 = vst.msk [vmem:[%s443 + $0x148] sm:$0xff] %vm487, %v2946
      %2995 = vst.msk [vmem:[%s443 + $0x150] sm:$0xff] %vm487, %v2947
      %2996 = vst.msk [vmem:[%s443 + $0x158] sm:$0xff] %vm487, %v2948
      %2997 = vst.msk [vmem:[%s443 + $0x160] sm:$0xff] %vm487, %v2949
      %2998 = vst.msk [vmem:[%s443 + $0x168] sm:$0xff] %vm487, %v2950
      %2999 = vst.msk [vmem:[%s443 + $0x170] sm:$0xff] %vm487, %v2951
      %3000 = vst.msk [vmem:[%s443 + $0x178] sm:$0xff] %vm487, %v2952
      %s3001 = smul.u32 48, %s23
      %p3002 = scmp.lt.s32.totalorder %s22, 1
      %s3003 = scalar_select %p3002, %s22, 1
      %p3004 = scmp.lt.s32.totalorder %s3001, 47
      %s3005 = scalar_select %p3004, %s3001, 47
      %s3006 = smul.addr %s3003, 48
      %s3007 = sadd.s32 %s3005, %s3006
      %s3008 = smul.addr %s3007, 8
      %s3009 = scalar_lea.vmem %s7, %s3008
      // Predicated region
      $region49: #{latlayer_forward.1} parent=47 // pred_check
        %p3010 = pneg %p234
      $region50: #{latlayer_forward.1} parent=47 // pred_check_branch
        %3012 = sbr.rel (%p3010) target = $region52
      $region51: #{latlayer_forward.1} parent=47 // pred_region
        %s3013 = smul.u32 48, %s23
      $region52: #{latlayer_forward.1} parent=47 // pred_fallthru
        _
    $region48: #{latlayer_forward.1} parent=5 // pred_fallthru
      _
    %p3014 = scmp.le.s32.totalorder 2, %s13
    // Predicated region
    $region53: #{latlayer_forward.1} parent=5 // pred_check
      %p3015 = pneg %p3014
    $region54: #{latlayer_forward.1} parent=5 // pred_check_branch
      %3017 = sbr.rel (%p3015) target = $region56
    $region55: #{latlayer_forward.1} parent=5 // pred_region
      %s3018 = ssub.s32 %s13, 2
      // Predicated region
      $region57: #{latlayer_forward.1} parent=55 // pred_check
        %p3019 = pneg %p240
      $region58: #{latlayer_forward.1} parent=55 // pred_check_branch
        %3021 = sbr.rel (%p3019) target = $region60
      $region59: #{latlayer_forward.1} parent=55 // pred_region
        %s3022 = smul.u32 48, %s25
        %p3023 = scmp.lt.s32.totalorder %s24, 1
        %s3024 = scalar_select %p3023, %s24, 1
        %p3025 = scmp.lt.s32.totalorder %s3022, 47
        %s3026 = scalar_select %p3025, %s3022, 47
        %s3027 = smul.addr %s3024, 48
        %s3028 = sadd.s32 %s3026, %s3027
        %s3029 = smul.addr %s3028, 8
        %s3030 = scalar_lea.vmem %s7, %s3029
      $region60: #{latlayer_forward.1} parent=55 // pred_fallthru
        _
    $region56: #{latlayer_forward.1} parent=5 // pred_fallthru
      _
  $region6: #{latlayer_forward.1} parent=0 // loop_footer
    %s17 = sadd.s32 1, %s13
  $region7: #{latlayer_forward.1} parent=0 // loop_footer_branch
    %12 = sbr.rel target = $region3
  $region8: #{latlayer_forward.1} parent=0 // loop_exit
    _

</llo_original>
